<compile_context>
chip_gen: v5e
topology: v5e:2x2
jax: 0.10.0
libtpu: 0.0.40
codegen_flags: <defaults>
</compile_context>

<pallas_src>
import jax
import jax.numpy as jnp
from jax import lax
from jax.experimental import pallas as pl
from jax.experimental.pallas import tpu as pltpu


def _round_up(x, m):
    return (x + m - 1) // m * m


def _make_kernel(half):
    """half = graph_embedding_size; logvar lanes of the graph encoding are [half, 2*half)."""

    def kernel(adj_ref, norm_ref, z1_ref, seg_ref, w2_ref, b1_ref, b2_ref,
               node_enc_ref, genc_ref, z2_ref):
        p = pl.program_id(0)        # phase 0: A@Z1 -> H1 -> Z2 ; phase 1: A@Z2 -> enc, readout
        i = pl.program_id(1)        # node-row tile
        tm = adj_ref.shape[0]
        row0 = pl.multiple_of(i * tm, tm)
        norm = norm_ref[...]        # [tm, 1] f32, D^-1/2 (precomputed in the wrapper)

        # --- phase 0: H1 = relu(D^-1/2 A Z1 + b1);  Z2 = D^-1/2 (H1 W2)  (bf16 scratch) ---
        @pl.when(p == 0)
        def _():
            agg = jnp.dot(adj_ref[...], z1_ref[...],
                          preferred_element_type=jnp.float32)                 # [tm, GP]
            h1 = jnp.maximum(norm * agg + b1_ref[...], 0.0)
            z2 = norm * jnp.dot(h1.astype(jnp.bfloat16), w2_ref[...],
                                preferred_element_type=jnp.float32)           # [tm, G2P]
            z2_ref[pl.ds(row0, tm), :] = z2.astype(jnp.bfloat16)

        # --- phase 1: node_encode = D^-1/2 A Z2 + b2;  graph readout + tanh(logvar) -------
        @pl.when(p == 1)
        def _():
            agg = jnp.dot(adj_ref[...], z2_ref[...],
                          preferred_element_type=jnp.float32)                 # [tm, G2P]
            enc = norm * agg + b2_ref[...]
            # NOTE: this output block is parked at row 0 during phase 0 and is fully
            # overwritten at (p=1, i=0) before its block index first changes, so no
            # garbage block is ever written back to HBM.
            node_enc_ref[...] = enc

            # Per-graph sum readout as one MXU matmul: [Bp, tm] @ [tm, G2P] -> [Bp, G2P],
            # accumulated into the resident graph-encoding block (seg is 0/1 -> bf16 exact).
            part = jnp.dot(seg_ref[...], enc.astype(jnp.bfloat16),
                           preferred_element_type=jnp.float32)

            @pl.when(i == 0)
            def _():
                genc_ref[...] = part

            @pl.when(i > 0)
            def _():
                genc_ref[...] += part

            @pl.when(i == pl.num_programs(1) - 1)
            def _():
                # tanh only on the logvar lanes, via a lane mask so the store stays a
                # single full-width (lane-dense) vst; mu and pad lanes pass through.
                g = genc_ref[...]
                lane = lax.broadcasted_iota(jnp.int32, g.shape, 1)
                logvar_lanes = (lane >= half) & (lane < 2 * half)
                genc_ref[...] = jnp.where(logvar_lanes, jnp.tanh(g), g)

    return kernel


def level_encoder_forward(adj, seg, node_depth, embed, params, *, tile_m=256):
    """LevelEncoder.forward.

    adj:   [N, N] f32 0/1 symmetric adjacency (dense dgl.to_bidirected(g))
    seg:   [B, N] f32 0/1 graph-membership matrix (dgl.readout_nodes sum readout)
    node_depth: [N] int32
    embed: [N, 3E] f32 (output of LevelEmbedding)
    params = (w1 [3E,G], b1 [G], w2 [G,2G], b2 [2G], depth_tab [50,1])
    """
    w1, b1, w2, b2, depth_tab = params
    N = adj.shape[0]
    B = seg.shape[0]
    F_IN = embed.shape[1]
    G = w1.shape[1]
    G2 = w2.shape[1]
    half = G2 // 2
    GP = _round_up(G, 128)                    # lane-dense layer-1 width
    G2P = _round_up(G2, 128)                  # lane-dense layer-2 width
    Np = _round_up(N, tile_m)                 # node dim padded to the row tile
    Bp = _round_up(B, 8)                      # sublane-aligned readout rows
    T = Np // tile_m

    f32, bf16 = jnp.float32, jnp.bfloat16

    # Node-dim padding: padded adj rows/cols and seg columns are zero, so padded nodes are
    # inert (deg clamp -> norm=1; their node_encode rows are just b2 and get sliced off;
    # they contribute nothing to the readout).
    adj_p = jnp.zeros((Np, Np), f32).at[:N, :N].set(adj.astype(f32))
    seg_p = jnp.zeros((Bp, Np), f32).at[:B, :N].set(seg.astype(f32))

    # D^-1/2 with DGL's clamp(min=1), computed once in XLA instead of per tile in-kernel.
    deg = jnp.sum(adj_p, axis=1, keepdims=True)
    norm = lax.rsqrt(jnp.maximum(deg, 1.0))                       # [Np, 1] f32

    # Layer-1 transform hoisted out of the kernel (saves a full adjacency pass and the
    # embed stream): Z1 = D^-1/2 (X W1), zero-padded to GP lanes, stored bf16.
    embed_p = jnp.zeros((Np, F_IN), f32).at[:N, :].set(embed.astype(f32))
    w1_p = jnp.zeros((F_IN, GP), f32).at[:, :G].set(w1.astype(f32))
    z1 = ((embed_p @ w1_p) * norm).astype(bf16)                   # [Np, GP]

    b1_p = jnp.zeros((1, GP), f32).at[:, :G].set(b1.reshape(1, G).astype(f32))
    w2_p = jnp.zeros((GP, G2P), bf16).at[:G, :G2].set(w2.astype(bf16))
    b2_p = jnp.zeros((1, G2P), f32).at[:, :G2].set(b2.reshape(1, G2).astype(f32))

    # Adjacency and seg streamed as bf16 (0/1 -> exact): halves HBM/VMEM traffic of the
    # dominant array and removes the per-tile f32->bf16 cast.
    adj_bf = adj_p.astype(bf16)
    seg_bf = seg_p.astype(bf16)

    kernel = _make_kernel(half)

    node_enc_pad, genc_pad = pl.pallas_call(
        kernel,
        grid_spec=pltpu.PrefetchScalarGridSpec(
            num_scalar_prefetch=0,
            grid=(2, T),                                                      # (phase, row tile)
            in_specs=[
                pl.BlockSpec((tile_m, Np), lambda p, i: (i, 0)),              # adj row tile (bf16)
                pl.BlockSpec((tile_m, 1), lambda p, i: (i, 0)),               # D^-1/2 row tile
                pl.BlockSpec((Np, GP), lambda p, i: (0, 0)),                  # Z1, resident (bf16)
                # seg is only used in phase 1; park on block 0 during phase 0 so its DMA
                # is skipped there (consecutive identical block indices).
                pl.BlockSpec((Bp, tile_m), lambda p, i: (0, jnp.where(p == 1, i, 0))),
                pl.BlockSpec((GP, G2P), lambda p, i: (0, 0)),                 # w2 (padded, bf16)
                pl.BlockSpec((1, GP), lambda p, i: (0, 0)),                   # b1 (padded)
                pl.BlockSpec((1, G2P), lambda p, i: (0, 0)),                  # b2 (padded)
            ],
            out_specs=(
                # node_encode is produced only in phase 1; the block is parked at row 0
                # before that and fully overwritten at (p=1, i=0) before the index changes.
                pl.BlockSpec((tile_m, G2P), lambda p, i: (jnp.where(p == 1, i, 0), 0)),
                # graph-encoding accumulator resident for the whole grid
                pl.BlockSpec((Bp, G2P), lambda p, i: (0, 0)),
            ),
            scratch_shapes=[
                pltpu.VMEM((Np, G2P), bf16),          # Z2 = D^-1/2 H1 W2 (bf16 scratch)
            ],
        ),
        out_shape=(
            jax.ShapeDtypeStruct((Np, G2P), f32),
            jax.ShapeDtypeStruct((Bp, G2P), f32),
        ),
        compiler_params=pltpu.CompilerParams(
            # The two phases and the readout accumulator are sequential dependencies.
            # TODO(synk): on v7x, split the two phases into separate pallas_calls (Z2 via
            # HBM) so the row-tile axis can be marked "parallel" across both TensorCores.
            dimension_semantics=("arbitrary", "arbitrary"),
            # TODO(synk): for very large N, K-tile the adjacency (grid (phase, i, k)) so the
            # footprint (resident Z1/Z2 + adj row tile) stays under the 64 MiB v7x VMEM.
            vmem_limit_bytes=48 * 1024 * 1024,
        ),
    )(adj_bf, norm, z1, seg_bf, w2_p, b1_p, b2_p)

    node_enc = node_enc_pad[:N, :G2]             # g.ndata['node_encode']
    graph_mu = genc_pad[:B, :half]
    graph_logvar = genc_pad[:B, half:G2]         # tanh already applied in-kernel

    # depth_weight = nn.Embedding(50, 1)(node_depth): a plain gather, no kernel needed.
    # TODO(synk): jnp.take clips out-of-range depths; torch.nn.Embedding would raise.
    depth_w = jnp.take(depth_tab, node_depth, axis=0)            # [N, 1]

    return graph_mu, graph_logvar, node_enc, depth_w


def _reference_f32(adj, seg, embed, params):
    """Pure f32 reference of the DGL forward."""
    w1, b1, w2, b2, _ = params
    deg = jnp.clip(jnp.sum(adj, axis=1, keepdims=True), 1.0, None)
    norm = deg ** -0.5
    h1 = jax.nn.relu((adj @ ((embed @ w1) * norm)) * norm + b1.reshape(1, -1))
    enc = (adj @ ((h1 @ w2) * norm)) * norm + b2.reshape(1, -1)
    genc = seg @ enc
    half = genc.shape[-1] // 2
    return genc[:, :half], jnp.tanh(genc[:, half:]), enc


def _reference_staged(adj, seg, embed, params):
    """Same algorithm with the kernel's exact bf16 staging points (adj/seg/Z1/H1/W2/Z2 and
    the readout operands in bf16, f32 accumulation & elementwise) -> tracks the kernel
    to ~1e-3 regardless of problem scale."""
    w1, b1, w2, b2, _ = params
    f32, bf16 = jnp.float32, jnp.bfloat16
    deg = jnp.sum(adj, axis=1, keepdims=True)
    norm = lax.rsqrt(jnp.maximum(deg, 1.0))
    adj_bf = adj.astype(bf16)
    z1 = ((embed @ w1) * norm).astype(bf16)
    h1 = jnp.maximum(norm * jnp.dot(adj_bf, z1, preferred_element_type=f32)
                     + b1.reshape(1, -1), 0.0)
    z2 = (norm * jnp.dot(h1.astype(bf16), w2.astype(bf16),
                         preferred_element_type=f32)).astype(bf16)
    enc = norm * jnp.dot(adj_bf, z2, preferred_element_type=f32) + b2.reshape(1, -1)
    genc = jnp.dot(seg.astype(bf16), enc.astype(bf16), preferred_element_type=f32)
    half = genc.shape[-1] // 2
    return genc[:, :half], jnp.tanh(genc[:, half:]), enc


if __name__ == "__main__":
    # small but non-trivial config: embedding_size=8 (3E=24), graph_embedding_size=32 (2G=64)
    # two chain graphs of 100 and 156 nodes batched block-diagonally, tile_m=128 -> 2 row
    # tiles (exercises the phase gating, the readout accumulation and the parked out-spec,
    # with a graph boundary that does NOT align with the tile boundary).
    N, B = 256, 2
    SIZES = (100, 156)
    EMB, G = 8, 32
    F_IN, G2 = 3 * EMB, 2 * G

    key = jax.random.PRNGKey(0)
    k_embed, k_w1, k_b1, k_w2, k_b2, k_dt = jax.random.split(key, 6)

    # chain edges i -> i+1 inside each graph, then symmetrized (dgl.to_bidirected)
    src = jnp.arange(N - 1)
    in_graph = (src != (SIZES[0] - 1)).astype(jnp.float32)   # no edge across the graph boundary
    adj = jnp.zeros((N, N), jnp.float32).at[src, src + 1].set(in_graph)
    adj = jnp.maximum(adj, adj.T)

    # graph membership (sum-readout matrix): graph 0 = nodes [0,100), graph 1 = [100,256)
    gid = (jnp.arange(N) >= SIZES[0]).astype(jnp.int32)
    seg = (gid[None, :] == jnp.arange(B)[:, None]).astype(jnp.float32)

    node_depth = jnp.arange(N, dtype=jnp.int32) % 7
    embed = jax.random.normal(k_embed, (N, F_IN), jnp.float32)

    params = (
        jax.random.normal(k_w1, (F_IN, G), jnp.float32) * 0.2,   # gcn1.weight
        jax.random.normal(k_b1, (G,), jnp.float32) * 0.1,        # gcn1.bias
        jax.random.normal(k_w2, (G, G2), jnp.float32) * 0.2,     # gcn2.weight
        jax.random.normal(k_b2, (G2,), jnp.float32) * 0.1,       # gcn2.bias
        jax.random.normal(k_dt, (50, 1), jnp.float32),           # depth_weight.weight
    )

    mu, logvar, node_enc, dw = jax.block_until_ready(
        level_encoder_forward(adj, seg, node_depth, embed, params, tile_m=128))

    assert mu.shape == (B, G) and logvar.shape == (B, G)
    assert node_enc.shape == (N, G2) and dw.shape == (N, 1)

    def max_rel(a, b):
        return float(jnp.max(jnp.abs(a - b)) / (jnp.max(jnp.abs(b)) + 1e-8))

    # Primary check: same algorithm with the kernel's bf16 staging points -> tight match.
    mu_s, logvar_s, enc_s = _reference_staged(adj, seg, embed, params)
    assert max_rel(node_enc, enc_s) < 1e-2
    assert max_rel(mu, mu_s) < 1e-2
    # |tanh a - tanh b| <= |a - b|: pre-tanh sums differ only by f32-accumulation-order /
    # ulp noise between the kernel and the staged reference.
    assert float(jnp.max(jnp.abs(logvar - logvar_s))) < 5e-2

    # Secondary sanity vs. a pure-f32 reference (bf16 MXU operands -> normalized tolerance).
    # logvar is tanh of a large-magnitude per-graph sum, so it is only checked against the
    # staged reference above (tanh of a near-zero sum would surface the benign bf16 error).
    mu_f, logvar_f, enc_f = _reference_f32(adj, seg, embed, params)
    assert max_rel(node_enc, enc_f) < 5e-2
    assert max_rel(mu, mu_f) < 5e-2

    assert jnp.allclose(dw, params[4][node_depth])

    print("KERNEL_OK")
</pallas_src>

<mosaic_0001>
module attributes {stable_mosaic.version = 11 : i64} {
  func.func @kernel(%arg0: i32, %arg1: i32, %arg2: memref<128x256xbf16, #tpu.memory_space<vmem>>, %arg3: memref<128x1xf32, #tpu.memory_space<vmem>>, %arg4: memref<256x128xbf16, #tpu.memory_space<vmem>>, %arg5: memref<8x128xbf16, #tpu.memory_space<vmem>>, %arg6: memref<128x128xbf16, #tpu.memory_space<vmem>>, %arg7: memref<1x128xf32, #tpu.memory_space<vmem>>, %arg8: memref<1x128xf32, #tpu.memory_space<vmem>>, %arg9: memref<128x128xf32, #tpu.memory_space<vmem>>, %arg10: memref<8x128xf32, #tpu.memory_space<vmem>>, %arg11: memref<256x128xbf16, #tpu.memory_space<vmem>>) attributes {dimension_semantics = [#tpu.dimension_semantics<arbitrary>, #tpu.dimension_semantics<arbitrary>], iteration_bounds = array<i64: 2, 2>, scalar_prefetch = 0 : i64, scratch_operands = 1 : i64, tpu.core_type = #tpu.core_type<tc>, window_params = [{transform_indices = @transform_0, window_bounds = array<i64: 128, 256>}, {transform_indices = @transform_1, window_bounds = array<i64: 128, 1>}, {pipeline_mode = #tpu.pipeline_mode<synchronous>, transform_indices = @transform_2, window_bounds = array<i64: 256, 128>}, {transform_indices = @transform_3, window_bounds = array<i64: 8, 128>}, {pipeline_mode = #tpu.pipeline_mode<synchronous>, transform_indices = @transform_4, window_bounds = array<i64: 128, 128>}, {pipeline_mode = #tpu.pipeline_mode<synchronous>, transform_indices = @transform_5, window_bounds = array<i64: 1, 128>}, {pipeline_mode = #tpu.pipeline_mode<synchronous>, transform_indices = @transform_6, window_bounds = array<i64: 1, 128>}, {transform_indices = @transform_7, window_bounds = array<i64: 128, 128>}, {pipeline_mode = #tpu.pipeline_mode<synchronous>, transform_indices = @transform_8, window_bounds = array<i64: 8, 128>}]} {
    %c128_i32 = arith.constant 128 : i32
    %0 = arith.muli %arg1, %c128_i32 : i32
    %1 = tpu.assume_multiple %0, 128 : i32
    %c0 = arith.constant 0 : index
    %c0_0 = arith.constant 0 : index
    %2 = vector.load %arg3[%c0, %c0_0] : memref<128x1xf32, #tpu.memory_space<vmem>>, vector<128x1xf32>
    %c0_i32 = arith.constant 0 : i32
    %3 = arith.cmpi eq, %arg0, %c0_i32 : i32
    %4 = arith.extui %3 : i1 to i32
    %c0_i32_1 = arith.constant 0 : i32
    %5 = arith.cmpi ne, %4, %c0_i32_1 : i32
    scf.if %5 {
      %c0_3 = arith.constant 0 : index
      %c0_4 = arith.constant 0 : index
      %9 = vector.load %arg2[%c0_3, %c0_4] : memref<128x256xbf16, #tpu.memory_space<vmem>>, vector<128x256xbf16>
      %c0_5 = arith.constant 0 : index
      %c0_6 = arith.constant 0 : index
      %10 = vector.load %arg4[%c0_5, %c0_6] : memref<256x128xbf16, #tpu.memory_space<vmem>>, vector<256x128xbf16>
      %cst = arith.constant dense<0.000000e+00> : vector<128x128xf32>
      %11 = tpu.matmul %9, %10, %cst {dimension_numbers = #tpu.dot_dimension_numbers<[1], [0], [0], [1], [0, 0, 1, 1], [], []>} : vector<128x256xbf16>, vector<256x128xbf16>, vector<128x128xf32> -> vector<128x128xf32>
      %12 = vector.broadcast %2 : vector<128x1xf32> to vector<128x128xf32>
      %13 = arith.mulf %12, %11 : vector<128x128xf32>
      %c0_7 = arith.constant 0 : index
      %c0_8 = arith.constant 0 : index
      %14 = vector.load %arg7[%c0_7, %c0_8] : memref<1x128xf32, #tpu.memory_space<vmem>>, vector<1x128xf32>
      %15 = vector.broadcast %14 : vector<1x128xf32> to vector<128x128xf32>
      %16 = arith.addf %13, %15 : vector<128x128xf32>
      %cst_9 = arith.constant 0.000000e+00 : f32
      %17 = vector.broadcast %cst_9 : f32 to vector<128x128xf32>
      %18 = arith.maximumf %16, %17 : vector<128x128xf32>
      %19 = arith.truncf %18 : vector<128x128xf32> to vector<128x128xbf16>
      %c0_10 = arith.constant 0 : index
      %c0_11 = arith.constant 0 : index
      %20 = vector.load %arg6[%c0_10, %c0_11] : memref<128x128xbf16, #tpu.memory_space<vmem>>, vector<128x128xbf16>
      %cst_12 = arith.constant dense<0.000000e+00> : vector<128x128xf32>
      %21 = tpu.matmul %19, %20, %cst_12 {dimension_numbers = #tpu.dot_dimension_numbers<[1], [0], [0], [1], [0, 0, 1, 1], [], []>} : vector<128x128xbf16>, vector<128x128xbf16>, vector<128x128xf32> -> vector<128x128xf32>
      %22 = vector.broadcast %2 : vector<128x1xf32> to vector<128x128xf32>
      %23 = arith.mulf %22, %21 : vector<128x128xf32>
      %24 = arith.truncf %23 : vector<128x128xf32> to vector<128x128xbf16>
      %25 = arith.index_cast %1 : i32 to index
      %c0_13 = arith.constant 0 : index
      %26 = vector.load %arg11[%25, %c0_13] : memref<256x128xbf16, #tpu.memory_space<vmem>>, vector<128x128xbf16>
      tpu.vector_store %arg11[%25, %c0_13], %24 {strides = array<i32>} : memref<256x128xbf16, #tpu.memory_space<vmem>>, vector<128x128xbf16>,
    } else {
    }
    %c1_i32 = arith.constant 1 : i32
    %6 = arith.cmpi eq, %arg0, %c1_i32 : i32
    %7 = arith.extui %6 : i1 to i32
    %c0_i32_2 = arith.constant 0 : i32
    %8 = arith.cmpi ne, %7, %c0_i32_2 : i32
    scf.if %8 {
      %c0_3 = arith.constant 0 : index
      %c0_4 = arith.constant 0 : index
      %9 = vector.load %arg2[%c0_3, %c0_4] : memref<128x256xbf16, #tpu.memory_space<vmem>>, vector<128x256xbf16>
      %c0_5 = arith.constant 0 : index
      %c0_6 = arith.constant 0 : index
      %10 = vector.load %arg11[%c0_5, %c0_6] : memref<256x128xbf16, #tpu.memory_space<vmem>>, vector<256x128xbf16>
      %cst = arith.constant dense<0.000000e+00> : vector<128x128xf32>
      %11 = tpu.matmul %9, %10, %cst {dimension_numbers = #tpu.dot_dimension_numbers<[1], [0], [0], [1], [0, 0, 1, 1], [], []>} : vector<128x256xbf16>, vector<256x128xbf16>, vector<128x128xf32> -> vector<128x128xf32>
      %12 = vector.broadcast %2 : vector<128x1xf32> to vector<128x128xf32>
      %13 = arith.mulf %12, %11 : vector<128x128xf32>
      %c0_7 = arith.constant 0 : index
      %c0_8 = arith.constant 0 : index
      %14 = vector.load %arg8[%c0_7, %c0_8] : memref<1x128xf32, #tpu.memory_space<vmem>>, vector<1x128xf32>
      %15 = vector.broadcast %14 : vector<1x128xf32> to vector<128x128xf32>
      %16 = arith.addf %13, %15 : vector<128x128xf32>
      %c0_9 = arith.constant 0 : index
      %c0_10 = arith.constant 0 : index
      %17 = vector.load %arg9[%c0_9, %c0_10] : memref<128x128xf32, #tpu.memory_space<vmem>>, vector<128x128xf32>
      tpu.vector_store %arg9[%c0_9, %c0_10], %16 {strides = array<i32>} : memref<128x128xf32, #tpu.memory_space<vmem>>, vector<128x128xf32>,
      %c0_11 = arith.constant 0 : index
      %c0_12 = arith.constant 0 : index
      %18 = vector.load %arg5[%c0_11, %c0_12] : memref<8x128xbf16, #tpu.memory_space<vmem>>, vector<8x128xbf16>
      %19 = arith.truncf %16 : vector<128x128xf32> to vector<128x128xbf16>
      %cst_13 = arith.constant dense<0.000000e+00> : vector<8x128xf32>
      %20 = tpu.matmul %18, %19, %cst_13 {dimension_numbers = #tpu.dot_dimension_numbers<[1], [0], [0], [1], [0, 0, 1, 1], [], []>} : vector<8x128xbf16>, vector<128x128xbf16>, vector<8x128xf32> -> vector<8x128xf32>
      %c0_i32_14 = arith.constant 0 : i32
      %21 = arith.cmpi eq, %arg1, %c0_i32_14 : i32
      %22 = arith.extui %21 : i1 to i32
      %c0_i32_15 = arith.constant 0 : i32
      %23 = arith.cmpi ne, %22, %c0_i32_15 : i32
      scf.if %23 {
        %c0_20 = arith.constant 0 : index
        %c0_21 = arith.constant 0 : index
        %30 = vector.load %arg10[%c0_20, %c0_21] : memref<8x128xf32, #tpu.memory_space<vmem>>, vector<8x128xf32>
        tpu.vector_store %arg10[%c0_20, %c0_21], %20 {strides = array<i32>} : memref<8x128xf32, #tpu.memory_space<vmem>>, vector<8x128xf32>,
      } else {
      }
      %c0_i32_16 = arith.constant 0 : i32
      %24 = arith.cmpi sgt, %arg1, %c0_i32_16 : i32
      %25 = arith.extui %24 : i1 to i32
      %c0_i32_17 = arith.constant 0 : i32
      %26 = arith.cmpi ne, %25, %c0_i32_17 : i32
      scf.if %26 {
        %c0_20 = arith.constant 0 : index
        %c0_21 = arith.constant 0 : index
        %30 = vector.load %arg10[%c0_20, %c0_21] : memref<8x128xf32, #tpu.memory_space<vmem>>, vector<8x128xf32>
        %31 = arith.addf %30, %20 : vector<8x128xf32>
        %c0_22 = arith.constant 0 : index
        %c0_23 = arith.constant 0 : index
        %32 = vector.load %arg10[%c0_22, %c0_23] : memref<8x128xf32, #tpu.memory_space<vmem>>, vector<8x128xf32>
        tpu.vector_store %arg10[%c0_22, %c0_23], %31 {strides = array<i32>} : memref<8x128xf32, #tpu.memory_space<vmem>>, vector<8x128xf32>,
      } else {
      }
      %c1_i32_18 = arith.constant 1 : i32
      %27 = arith.cmpi eq, %arg1, %c1_i32_18 : i32
      %28 = arith.extui %27 : i1 to i32
      %c0_i32_19 = arith.constant 0 : i32
      %29 = arith.cmpi ne, %28, %c0_i32_19 : i32
      scf.if %29 {
        %c0_20 = arith.constant 0 : index
        %c0_21 = arith.constant 0 : index
        %30 = vector.load %arg10[%c0_20, %c0_21] : memref<8x128xf32, #tpu.memory_space<vmem>>, vector<8x128xf32>
        %31 = tpu.iota {dimensions = array<i32: 1>} : vector<8x128xi32>
        %c32_i32 = arith.constant 32 : i32
        %32 = vector.broadcast %c32_i32 : i32 to vector<8x128xi32>
        %33 = arith.cmpi sge, %31, %32 : vector<8x128xi32>
        %c64_i32 = arith.constant 64 : i32
        %34 = vector.broadcast %c64_i32 : i32 to vector<8x128xi32>
        %35 = arith.cmpi slt, %31, %34 : vector<8x128xi32>
        %36 = arith.andi %33, %35 : vector<8x128xi1>
        %37 = math.tanh %30 : vector<8x128xf32>
        %38 = arith.select %36, %37, %30 : vector<8x128xi1>, vector<8x128xf32>
        %c0_22 = arith.constant 0 : index
        %c0_23 = arith.constant 0 : index
        %39 = vector.load %arg10[%c0_22, %c0_23] : memref<8x128xf32, #tpu.memory_space<vmem>>, vector<8x128xf32>
        tpu.vector_store %arg10[%c0_22, %c0_23], %38 {strides = array<i32>} : memref<8x128xf32, #tpu.memory_space<vmem>>, vector<8x128xf32>,
      } else {
      }
    } else {
    }
    return
  }
  func.func @transform_0(%arg0: i32, %arg1: i32) -> (i32, i32) {
    %c0_i32 = arith.constant 0 : i32
    %c0_i32_0 = arith.constant 0 : i32
    return %arg1, %c0_i32 : i32, i32
  }
  func.func @transform_1(%arg0: i32, %arg1: i32) -> (i32, i32) {
    %c0_i32 = arith.constant 0 : i32
    %c0_i32_0 = arith.constant 0 : i32
    return %arg1, %c0_i32 : i32, i32
  }
  func.func @transform_2(%arg0: i32, %arg1: i32) -> (i32, i32) {
    %c0_i32 = arith.constant 0 : i32
    %c0_i32_0 = arith.constant 0 : i32
    %c0_i32_1 = arith.constant 0 : i32
    return %c0_i32, %c0_i32_0 : i32, i32
  }
  func.func @transform_3(%arg0: i32, %arg1: i32) -> (i32, i32) {
    %c1_i32 = arith.constant 1 : i32
    %0 = arith.cmpi eq, %arg0, %c1_i32 : i32
    %c0_i32 = arith.constant 0 : i32
    %1 = arith.select %0, %arg1, %c0_i32 : i32
    %c0_i32_0 = arith.constant 0 : i32
    %c0_i32_1 = arith.constant 0 : i32
    return %c0_i32_0, %1 : i32, i32
  }
  func.func @transform_4(%arg0: i32, %arg1: i32) -> (i32, i32) {
    %c0_i32 = arith.constant 0 : i32
    %c0_i32_0 = arith.constant 0 : i32
    %c0_i32_1 = arith.constant 0 : i32
    return %c0_i32, %c0_i32_0 : i32, i32
  }
  func.func @transform_5(%arg0: i32, %arg1: i32) -> (i32, i32) {
    %c0_i32 = arith.constant 0 : i32
    %c0_i32_0 = arith.constant 0 : i32
    %c0_i32_1 = arith.constant 0 : i32
    return %c0_i32, %c0_i32_0 : i32, i32
  }
  func.func @transform_6(%arg0: i32, %arg1: i32) -> (i32, i32) {
    %c0_i32 = arith.constant 0 : i32
    %c0_i32_0 = arith.constant 0 : i32
    %c0_i32_1 = arith.constant 0 : i32
    return %c0_i32, %c0_i32_0 : i32, i32
  }
  func.func @transform_7(%arg0: i32, %arg1: i32) -> (i32, i32) {
    %c1_i32 = arith.constant 1 : i32
    %0 = arith.cmpi eq, %arg0, %c1_i32 : i32
    %c0_i32 = arith.constant 0 : i32
    %1 = arith.select %0, %arg1, %c0_i32 : i32
    %c0_i32_0 = arith.constant 0 : i32
    %c0_i32_1 = arith.constant 0 : i32
    return %1, %c0_i32_0 : i32, i32
  }
  func.func @transform_8(%arg0: i32, %arg1: i32) -> (i32, i32) {
    %c0_i32 = arith.constant 0 : i32
    %c0_i32_0 = arith.constant 0 : i32
    %c0_i32_1 = arith.constant 0 : i32
    return %c0_i32, %c0_i32_0 : i32, i32
  }
}

</mosaic_0001>

<llo_original>
// kernel: tpu_custom_call.1
$region0: #{tpu_custom_call.1}
  #allocation0 [shape = 'u32[]', space=smem, size = 0x4, offset = 0x4, fixed_abs, tag = 'smem constant byte address 0x4 - core index']
  #allocation1 [shape = 'u32[72,128]{1,0:T(1,128)}', space=vmem, size = 0x9000, scoped, tag = 'internal scratch']
  #allocation2 [shape = 'bf16[256,128]{1,0:T(8,128)(2,1)}', space=vmem, size = 0x10000, scoped, tag = 'scratch operand']
  %s0 = inlined_call_operand.vmem [shape: bf16[256,256], index: 0, kind: input, shape index: {}]
  %s1 = inlined_call_operand.vmem [shape: f32[256,1], index: 1, kind: input, shape index: {}]
  %s2 = inlined_call_operand.hbm [shape: bf16[256,128], index: 2, kind: input, shape index: {}]
  %s3 = inlined_call_operand.hbm [shape: bf16[8,256], index: 3, kind: input, shape index: {}]
  %s4 = inlined_call_operand.hbm [shape: bf16[128,128], index: 4, kind: input, shape index: {}]
  %s5 = inlined_call_operand.vmem [shape: f32[1,128], index: 5, kind: input, shape index: {}]
  %s6 = inlined_call_operand.vmem [shape: f32[1,128], index: 6, kind: input, shape index: {}]
  %s7 = inlined_call_operand.hbm [shape: f32[256,128], index: 7, kind: output, shape index: {0}]
  %s8 = inlined_call_operand.hbm [shape: f32[8,128], index: 8, kind: output, shape index: {1}]
  %9 = xla_tuple %s7, %s8
  %s10 = sld [smem:[#allocation0]]
  $region101: #{tpu_custom_call.1} parent=0
    _
  %s12 = ssub.s32 1, %s10
  %s13 = scalar_select 0, %s12, %s10
  $region1: #{tpu_custom_call.1} parent=0
    #allocation3 [shape = 'u8[65536]{0}', space=vmem, size = 0x10000, scoped, tag = 'input window, operand 2, single buffered']
    #allocation4 [shape = 's32[2]{0}', space=sflag, size = 0x8, scoped, tag = 'scoped memory for tpu_custom_call.1']
    #allocation5 [shape = 's32[2]{0}', space=sflag, size = 0x8, scoped, tag = 'scoped memory for tpu_custom_call.1']
    #allocation6 [shape = 'u8[4096]{0}', space=vmem, size = 0x1000, scoped, tag = 'input window, operand 3']
    #allocation7 [shape = 's32[2]{0}', space=sflag, size = 0x8, scoped, tag = 'scoped memory for tpu_custom_call.1']
    #allocation8 [shape = 'u8[32768]{0}', space=vmem, size = 0x8000, scoped, tag = 'input window, operand 4, single buffered']
    #allocation9 [shape = 'u8[131072]{0}', space=vmem, size = 0x20000, scoped, tag = 'output window, operand 0']
    #allocation10 [shape = 'u8[4096]{0}', space=vmem, size = 0x1000, scoped, tag = 'output window, operand 1, single buffered']
    #allocation11 [shape = 's32[1]{0}', space=sflag, size = 0x4, scoped, tag = 'scoped memory for tpu_custom_call.1']
    %14 = vsyncpa [#allocation4], 0
    %15 = vsyncpa [#allocation7], 0
    %s16 = scalar_lea.sflag [#allocation7], 1
    %17 = vsyncpa %s16, 0
    %18 = vsyncpa [#allocation5], 0
    %s19 = scalar_lea.sflag [#allocation5], 1
    %20 = vsyncpa %s19, 0
    %21 = vsyncpa [#allocation11], 0
    loop: start=0, step=1, limit=6
    $region2: #{tpu_custom_call.1} parent=1 // loop_pre_header
      _
    $region3: #{tpu_custom_call.1} parent=1 // loop_header
      %s23 = sphi 0, %s27
      %p24 = scmp.ge.s32.totalorder %s23, 6
      %s30 = sphi 0, %s42
      %s31 = sphi 0, %s38
      %s32 = sphi 0, %s30
      %s33 = sphi 0, %s31
      %s34 = sphi 0, %s32
      %s35 = sphi 0, %s33
      %s45 = sphi 0, %s47
      %s48 = sphi 0, %s45
      %s49 = sphi 0, %s48
      %s65 = sphi 0, %s49
      %s71 = sphi 0, %s73
      %s74 = sphi 0, %s71
      %s75 = sphi 0, %s74
      %s91 = sphi 0, %s75
      %s95 = sphi 0, %s95
      %s97 = sphi 0, %s95
      %s98 = sphi 0, %s97
      %s112 = sphi 0, %s98
      %s122 = sphi 0, %s124
      %s125 = sphi 0, %s122
      %s126 = sphi 0, %s125
      %s142 = sphi 0, %s126
      %s146 = sphi 0, %s146
      %s148 = sphi 0, %s146
      %s149 = sphi 0, %s148
      %s163 = sphi 0, %s149
      %s167 = sphi 0, %s167
      %s169 = sphi 0, %s167
      %s170 = sphi 0, %s169
      %s184 = sphi 0, %s170
      %s188 = sphi 0, %s188
      %s190 = sphi 0, %s188
      %s191 = sphi 0, %s190
      %s205 = sphi 0, %s191
      %s215 = sphi 0, %s217
      %s218 = sphi 0, %s215
      %s219 = sphi 0, %s218
      %s235 = sphi 0, %s219
      %s239 = sphi 0, %s239
      %s241 = sphi 0, %s239
      %s242 = sphi 0, %s241
      %s256 = sphi 0, %s242
    $region4: #{tpu_custom_call.1} parent=1 // loop_header_branch
      %26 = sbr.rel (%p24) target = $region8
    $region5: #{tpu_custom_call.1} parent=1 // loop_body
      %s28 = ssub.s32 %s23, 1
      %s29 = ssub.s32 %s23, 2
      %s36 = sadd.s32 1, %s31
      %p37 = scmp.ge.s32.totalorder %s36, 2
      %s38 = scalar_select %p37, 0, %s36
      %s39 = sadd.s32 1, %s30
      %s40 = scalar_select %p37, %s39, %s30
      %p41 = scmp.ge.s32.totalorder %s40, 2
      %s42 = scalar_select %p41, 0, %s40
      %s43 = ssub.s32 %s31, %s38
      %p44 = scmp.eq.s32.totalorder %s43, 0
      %s46 = sadd.s32 %s45, 1
      %s47 = scalar_select %p44, %s45, %s46
      %p50 = pneg %p44
      %p51 = scmp.eq.s32.totalorder %s23, 3
      %p52 = por %p50, %p51
      %p53 = scmp.ne.s32.totalorder %s45, %s48
      %p54 = scmp.eq.s32.totalorder %s23, 0
      %p55 = por %p53, %p54
      %p56 = scmp.ne.s32.totalorder %s45, %s48
      %p57 = scmp.eq.s32.totalorder %s28, 3
      %p58 = por %p56, %p57
      %p59 = scmp.ne.s32.totalorder %s48, %s49
      %p60 = scmp.eq.s32.totalorder %s28, 0
      %p61 = por %p59, %p60
      %p62 = scmp.ne.s32.totalorder %s48, %s49
      %p63 = scmp.eq.s32.totalorder %s29, 3
      %p64 = por %p62, %p63
      %p66 = scmp.ne.s32.totalorder %s49, %s65
      %p67 = scmp.eq.s32.totalorder %s29, 0
      %p68 = por %p66, %p67
      %s69 = ssub.s32 %s31, %s38
      %p70 = scmp.eq.s32.totalorder %s69, 0
      %s72 = sadd.s32 %s71, 1
      %s73 = scalar_select %p70, %s71, %s72
      %p76 = pneg %p70
      %p77 = scmp.eq.s32.totalorder %s23, 3
      %p78 = por %p76, %p77
      %p79 = scmp.ne.s32.totalorder %s71, %s74
      %p80 = scmp.eq.s32.totalorder %s23, 0
      %p81 = por %p79, %p80
      %p82 = scmp.ne.s32.totalorder %s71, %s74
      %p83 = scmp.eq.s32.totalorder %s28, 3
      %p84 = por %p82, %p83
      %p85 = scmp.ne.s32.totalorder %s74, %s75
      %p86 = scmp.eq.s32.totalorder %s28, 0
      %p87 = por %p85, %p86
      %p88 = scmp.ne.s32.totalorder %s74, %s75
      %p89 = scmp.eq.s32.totalorder %s29, 3
      %p90 = por %p88, %p89
      %p92 = scmp.ne.s32.totalorder %s75, %s91
      %p93 = scmp.eq.s32.totalorder %s29, 0
      %p94 = por %p92, %p93
      %s96 = sadd.s32 %s95, 1
      %p99 = scmp.eq.s32.totalorder %s23, 3
      %p100 = scmp.ne.s32.totalorder %s95, %s97
      %p101 = scmp.eq.s32.totalorder %s23, 0
      %p102 = por %p100, %p101
      %p103 = scmp.ne.s32.totalorder %s95, %s97
      %p104 = scmp.eq.s32.totalorder %s28, 3
      %p105 = por %p103, %p104
      %p106 = scmp.ne.s32.totalorder %s97, %s98
      %p107 = scmp.eq.s32.totalorder %s28, 0
      %p108 = por %p106, %p107
      %p109 = scmp.ne.s32.totalorder %s97, %s98
      %p110 = scmp.eq.s32.totalorder %s29, 3
      %p111 = por %p109, %p110
      %p113 = scmp.ne.s32.totalorder %s98, %s112
      %p114 = scmp.eq.s32.totalorder %s29, 0
      %p115 = por %p113, %p114
      %p116 = scmp.eq.s32.totalorder %s30, 1
      %s117 = scalar_select %p116, %s31, 0
      %p118 = scmp.eq.s32.totalorder %s42, 1
      %s119 = scalar_select %p118, %s38, 0
      %s120 = ssub.s32 %s117, %s119
      %p121 = scmp.eq.s32.totalorder %s120, 0
      %s123 = sadd.s32 %s122, 1
      %s124 = scalar_select %p121, %s122, %s123
      %p127 = pneg %p121
      %p128 = scmp.eq.s32.totalorder %s23, 3
      %p129 = por %p127, %p128
      %p130 = scmp.ne.s32.totalorder %s122, %s125
      %p131 = scmp.eq.s32.totalorder %s23, 0
      %p132 = por %p130, %p131
      %p133 = scmp.ne.s32.totalorder %s122, %s125
      %p134 = scmp.eq.s32.totalorder %s28, 3
      %p135 = por %p133, %p134
      %p136 = scmp.ne.s32.totalorder %s125, %s126
      %p137 = scmp.eq.s32.totalorder %s28, 0
      %p138 = por %p136, %p137
      %p139 = scmp.ne.s32.totalorder %s125, %s126
      %p140 = scmp.eq.s32.totalorder %s29, 3
      %p141 = por %p139, %p140
      %p143 = scmp.ne.s32.totalorder %s126, %s142
      %p144 = scmp.eq.s32.totalorder %s29, 0
      %p145 = por %p143, %p144
      %s147 = sadd.s32 %s146, 1
      %p150 = scmp.eq.s32.totalorder %s23, 3
      %p151 = scmp.ne.s32.totalorder %s146, %s148
      %p152 = scmp.eq.s32.totalorder %s23, 0
      %p153 = por %p151, %p152
      %p154 = scmp.ne.s32.totalorder %s146, %s148
      %p155 = scmp.eq.s32.totalorder %s28, 3
      %p156 = por %p154, %p155
      %p157 = scmp.ne.s32.totalorder %s148, %s149
      %p158 = scmp.eq.s32.totalorder %s28, 0
      %p159 = por %p157, %p158
      %p160 = scmp.ne.s32.totalorder %s148, %s149
      %p161 = scmp.eq.s32.totalorder %s29, 3
      %p162 = por %p160, %p161
      %p164 = scmp.ne.s32.totalorder %s149, %s163
      %p165 = scmp.eq.s32.totalorder %s29, 0
      %p166 = por %p164, %p165
      %s168 = sadd.s32 %s167, 1
      %p171 = scmp.eq.s32.totalorder %s23, 3
      %p172 = scmp.ne.s32.totalorder %s167, %s169
      %p173 = scmp.eq.s32.totalorder %s23, 0
      %p174 = por %p172, %p173
      %p175 = scmp.ne.s32.totalorder %s167, %s169
      %p176 = scmp.eq.s32.totalorder %s28, 3
      %p177 = por %p175, %p176
      %p178 = scmp.ne.s32.totalorder %s169, %s170
      %p179 = scmp.eq.s32.totalorder %s28, 0
      %p180 = por %p178, %p179
      %p181 = scmp.ne.s32.totalorder %s169, %s170
      %p182 = scmp.eq.s32.totalorder %s29, 3
      %p183 = por %p181, %p182
      %p185 = scmp.ne.s32.totalorder %s170, %s184
      %p186 = scmp.eq.s32.totalorder %s29, 0
      %p187 = por %p185, %p186
      %s189 = sadd.s32 %s188, 1
      %p192 = scmp.eq.s32.totalorder %s23, 3
      %p193 = scmp.ne.s32.totalorder %s188, %s190
      %p194 = scmp.eq.s32.totalorder %s23, 0
      %p195 = por %p193, %p194
      %p196 = scmp.ne.s32.totalorder %s188, %s190
      %p197 = scmp.eq.s32.totalorder %s28, 3
      %p198 = por %p196, %p197
      %p199 = scmp.ne.s32.totalorder %s190, %s191
      %p200 = scmp.eq.s32.totalorder %s28, 0
      %p201 = por %p199, %p200
      %p202 = scmp.ne.s32.totalorder %s190, %s191
      %p203 = scmp.eq.s32.totalorder %s29, 3
      %p204 = por %p202, %p203
      %p206 = scmp.ne.s32.totalorder %s191, %s205
      %p207 = scmp.eq.s32.totalorder %s29, 0
      %p208 = por %p206, %p207
      %p209 = scmp.eq.s32.totalorder %s30, 1
      %s210 = scalar_select %p209, %s31, 0
      %p211 = scmp.eq.s32.totalorder %s42, 1
      %s212 = scalar_select %p211, %s38, 0
      %s213 = ssub.s32 %s210, %s212
      %p214 = scmp.eq.s32.totalorder %s213, 0
      %s216 = sadd.s32 %s215, 1
      %s217 = scalar_select %p214, %s215, %s216
      %p220 = pneg %p214
      %p221 = scmp.eq.s32.totalorder %s23, 3
      %p222 = por %p220, %p221
      %p223 = scmp.ne.s32.totalorder %s215, %s218
      %p224 = scmp.eq.s32.totalorder %s23, 0
      %p225 = por %p223, %p224
      %p226 = scmp.ne.s32.totalorder %s215, %s218
      %p227 = scmp.eq.s32.totalorder %s28, 3
      %p228 = por %p226, %p227
      %p229 = scmp.ne.s32.totalorder %s218, %s219
      %p230 = scmp.eq.s32.totalorder %s28, 0
      %p231 = por %p229, %p230
      %p232 = scmp.ne.s32.totalorder %s218, %s219
      %p233 = scmp.eq.s32.totalorder %s29, 3
      %p234 = por %p232, %p233
      %p236 = scmp.ne.s32.totalorder %s219, %s235
      %p237 = scmp.eq.s32.totalorder %s29, 0
      %p238 = por %p236, %p237
      %s240 = sadd.s32 %s239, 1
      %p243 = scmp.eq.s32.totalorder %s23, 3
      %p244 = scmp.ne.s32.totalorder %s239, %s241
      %p245 = scmp.eq.s32.totalorder %s23, 0
      %p246 = por %p244, %p245
      %p247 = scmp.ne.s32.totalorder %s239, %s241
      %p248 = scmp.eq.s32.totalorder %s28, 3
      %p249 = por %p247, %p248
      %p250 = scmp.ne.s32.totalorder %s241, %s242
      %p251 = scmp.eq.s32.totalorder %s28, 0
      %p252 = por %p250, %p251
      %p253 = scmp.ne.s32.totalorder %s241, %s242
      %p254 = scmp.eq.s32.totalorder %s29, 3
      %p255 = por %p253, %p254
      %p257 = scmp.ne.s32.totalorder %s242, %s256
      %p258 = scmp.eq.s32.totalorder %s29, 0
      %p259 = por %p257, %p258
      %p260 = scmp.le.s32.totalorder 1, %s23
      %p261 = scmp.lt.s32.totalorder %s23, 5
      %p262 = pnand %p260, %p261
      %p263 = pneg %p262
      // Predicated region
      $region9: #{tpu_custom_call.1} parent=5 // pred_check
        _
      $region10: #{tpu_custom_call.1} parent=5 // pred_check_branch
        %265 = sbr.rel (%p262) target = $region12
      $region11: #{tpu_custom_call.1} parent=5 // pred_region
        %s266 = ssub.s32 %s23, 1
        // Predicated region
        $region13: #{tpu_custom_call.1} parent=11 // pred_check
          %p267 = pneg %p108
        $region14: #{tpu_custom_call.1} parent=11 // pred_check_branch
          %269 = sbr.rel (%p267) target = $region16
        $region15: #{tpu_custom_call.1} parent=11 // pred_region
          %271 = vsyncadd [#allocation4], 0
          %s272 = sshll.u32 %s2, 4
          %s273 = int_to_ptr.hbm [resolvable:$true] %s272
          %s274 = sshll.u32 [#allocation3], 4
          %s275 = int_to_ptr.vmem [resolvable:$true] %s274
          %280 = dma.hbm_to_vmem [thread:$0]  %s273, 2048, %s275, [#allocation4], 64, 64, 4
        $region16: #{tpu_custom_call.1} parent=11 // pred_fallthru
          _
        // Predicated region
        $region17: #{tpu_custom_call.1} parent=11 // pred_check
          %p281 = pneg %p159
        $region18: #{tpu_custom_call.1} parent=11 // pred_check_branch
          %283 = sbr.rel (%p281) target = $region20
        $region19: #{tpu_custom_call.1} parent=11 // pred_region
          %285 = vsyncadd [#allocation7], 0
          %s286 = sshll.u32 %s4, 4
          %s287 = int_to_ptr.hbm [resolvable:$true] %s286
          %s288 = sshll.u32 [#allocation8], 4
          %s289 = int_to_ptr.vmem [resolvable:$true] %s288
          %294 = dma.hbm_to_vmem [thread:$0]  %s287, 1024, %s289, [#allocation7], 64, 64, 4
        $region20: #{tpu_custom_call.1} parent=11 // pred_fallthru
          _
        // Predicated region
        $region21: #{tpu_custom_call.1} parent=11 // pred_check
          %p295 = pneg %p180
        $region22: #{tpu_custom_call.1} parent=11 // pred_check_branch
          %297 = sbr.rel (%p295) target = $region24
        $region23: #{tpu_custom_call.1} parent=11 // pred_region
          _
        $region24: #{tpu_custom_call.1} parent=11 // pred_fallthru
          _
        // Predicated region
        $region25: #{tpu_custom_call.1} parent=11 // pred_check
          %p298 = pneg %p201
        $region26: #{tpu_custom_call.1} parent=11 // pred_check_branch
          %300 = sbr.rel (%p298) target = $region28
        $region27: #{tpu_custom_call.1} parent=11 // pred_region
          _
        $region28: #{tpu_custom_call.1} parent=11 // pred_fallthru
          _
      $region12: #{tpu_custom_call.1} parent=5 // pred_fallthru
        _
      %p301 = scmp.lt.s32.totalorder %s23, 4
      // Predicated region
      $region29: #{tpu_custom_call.1} parent=5 // pred_check
        %p302 = pneg %p301
      $region30: #{tpu_custom_call.1} parent=5 // pred_check_branch
        %304 = sbr.rel (%p302) target = $region32
      $region31: #{tpu_custom_call.1} parent=5 // pred_region
        // Predicated region
        $region33: #{tpu_custom_call.1} parent=31 // pred_check
          %p305 = pneg %p55
        $region34: #{tpu_custom_call.1} parent=31 // pred_check_branch
          %307 = sbr.rel (%p305) target = $region36
        $region35: #{tpu_custom_call.1} parent=31 // pred_region
          %s308 = smul.u32 16, %s31
          %p309 = scmp.lt.s32.totalorder %s308, 31
          %s310 = scalar_select %p309, %s308, 31
          %s311 = smul.addr %s310, 2
          %s312 = smul.addr %s311, 4
          %s313 = scalar_lea.vmem %s0, %s312
          %s314 = smul.u32 16, %s31
        $region36: #{tpu_custom_call.1} parent=31 // pred_fallthru
          _
        // Predicated region
        $region37: #{tpu_custom_call.1} parent=31 // pred_check
          %p315 = pneg %p81
        $region38: #{tpu_custom_call.1} parent=31 // pred_check_branch
          %317 = sbr.rel (%p315) target = $region40
        $region39: #{tpu_custom_call.1} parent=31 // pred_region
          %s318 = smul.u32 16, %s31
          %p319 = scmp.lt.s32.totalorder %s318, 31
          %s320 = scalar_select %p319, %s318, 31
          %s321 = smul.addr %s320, 8
          %s322 = scalar_lea.vmem %s1, %s321
          %s323 = smul.u32 16, %s31
        $region40: #{tpu_custom_call.1} parent=31 // pred_fallthru
          _
        // Predicated region
        $region41: #{tpu_custom_call.1} parent=31 // pred_check
          %p324 = pneg %p132
        $region42: #{tpu_custom_call.1} parent=31 // pred_check_branch
          %326 = sbr.rel (%p324) target = $region44
        $region43: #{tpu_custom_call.1} parent=31 // pred_region
          %s327 = sand.u32 %s23, 1
          %s328 = scalar_lea.sflag [#allocation7], %s327
          %s329 = sand.u32 %s122, 1
          %s330 = smul.addr %s329, 4
          %s331 = scalar_lea.vmem [#allocation6], %s330
          %p332 = scmp.eq.s32.totalorder %s30, 1
          %s333 = scalar_select %p332, %s31, 0
          %335 = vsyncadd %s328, 0
          %s336 = smul.addr %s333, 4
          %s337 = scalar_lea.hbm %s3, %s336
          %s339 = sshll.u32 %s337, 4
          %s340 = int_to_ptr.hbm [resolvable:$true] %s339
          %s341 = sshll.u32 %s331, 4
          %s342 = int_to_ptr.vmem [resolvable:$true] %s341
          %344 = dma.hbm_to_vmem [thread:$0]  %s340, 64, %s342, %s328
        $region44: #{tpu_custom_call.1} parent=31 // pred_fallthru
          _
      $region32: #{tpu_custom_call.1} parent=5 // pred_fallthru
        _
      %p345 = scmp.le.s32.totalorder 1, %s23
      %p346 = scmp.lt.s32.totalorder %s23, 5
      %p347 = pnand %p345, %p346
      %p348 = pneg %p347
      // Predicated region
      $region45: #{tpu_custom_call.1} parent=5 // pred_check
        _
      $region46: #{tpu_custom_call.1} parent=5 // pred_check_branch
        %350 = sbr.rel (%p347) target = $region48
      $region47: #{tpu_custom_call.1} parent=5 // pred_region
        %s351 = ssub.s32 %s23, 1
        // Predicated region
        $region49: #{tpu_custom_call.1} parent=47 // pred_check
          %p352 = pneg %p108
        $region50: #{tpu_custom_call.1} parent=47 // pred_check_branch
          %354 = sbr.rel (%p352) target = $region52
        $region51: #{tpu_custom_call.1} parent=47 // pred_region
          %356 = dma.done [#allocation4], 2048
        $region52: #{tpu_custom_call.1} parent=47 // pred_fallthru
          _
        %s357 = sand.u32 %s28, 1
        %s358 = scalar_lea.sflag [#allocation7], %s357
        %s359 = sand.u32 %s125, 1
        %s360 = smul.addr %s359, 4
        %s361 = scalar_lea.vmem [#allocation6], %s360
        // Predicated region
        $region53: #{tpu_custom_call.1} parent=47 // pred_check
          %p362 = pneg %p138
        $region54: #{tpu_custom_call.1} parent=47 // pred_check_branch
          %364 = sbr.rel (%p362) target = $region56
        $region55: #{tpu_custom_call.1} parent=47 // pred_region
          %366 = dma.done %s358, 64
        $region56: #{tpu_custom_call.1} parent=47 // pred_fallthru
          _
        // Predicated region
        $region57: #{tpu_custom_call.1} parent=47 // pred_check
          %p367 = pneg %p159
        $region58: #{tpu_custom_call.1} parent=47 // pred_check_branch
          %369 = sbr.rel (%p367) target = $region60
        $region59: #{tpu_custom_call.1} parent=47 // pred_region
          %371 = dma.done [#allocation7], 1024
        $region60: #{tpu_custom_call.1} parent=47 // pred_fallthru
          _
        %s372 = smul.u32 16, %s33
        %p373 = scmp.lt.s32.totalorder %s372, 31
        %s374 = scalar_select %p373, %s372, 31
        %s375 = smul.addr %s374, 2
        %s376 = smul.addr %s375, 4
        %s377 = scalar_lea.vmem %s0, %s376
        %p378 = pneg %p61
        %p379 = pneg %p58
        %s380 = smul.u32 16, %s33
        %p381 = scmp.lt.s32.totalorder %s380, 31
        %s382 = scalar_select %p381, %s380, 31
        %s383 = smul.addr %s382, 8
        %s384 = scalar_lea.vmem %s1, %s383
        %p385 = pneg %p87
        %p386 = pneg %p84
        %p387 = pneg %p108
        %p388 = pneg %p105
        %s389 = sand.u32 %s28, 1
        %s390 = scalar_lea.sflag [#allocation7], %s389
        %s391 = sand.u32 %s125, 1
        %s392 = smul.addr %s391, 4
        %s393 = scalar_lea.vmem [#allocation6], %s392
        %p394 = pneg %p138
        %p395 = pneg %p135
        %p396 = pneg %p159
        %p397 = pneg %p156
        %p398 = pneg %p180
        %p399 = pneg %p177
        %p400 = pneg %p201
        %p401 = pneg %p198
        %p402 = pneg %p231
        %p403 = pneg %p228
        %s404 = sand.u32 %s218, 1
        %s405 = scalar_lea.sflag [#allocation5], %s404
        %s406 = sand.u32 %s218, 1
        %s407 = smul.addr %s406, 128
        %s408 = scalar_lea.vmem [#allocation9], %s407
        %p409 = pneg %p252
        %p410 = pneg %p249
        %s411 = smul.u32 16, %s33
        %p412 = scmp.lt.s32.totalorder %s411, 31
        %s413 = scalar_select %p412, %s411, 31
        %s414 = smul.addr %s413, 2
        %s415 = smul.addr %s414, 4
        %s416 = scalar_lea.vmem %s0, %s415
        %s417 = smul.u32 16, %s33
        %s418 = smul.u32 16, %s33
        %p419 = scmp.lt.s32.totalorder %s418, 31
        %s420 = scalar_select %p419, %s418, 31
        %s421 = smul.addr %s420, 8
        %s422 = scalar_lea.vmem %s1, %s421
        %s423 = smul.u32 16, %s33
        %p424 = scmp.eq.s32.totalorder %s32, 1
        %s425 = scalar_select %p424, %s33, 0
        %p426 = scmp.eq.s32.totalorder %s32, 1
        %s427 = scalar_select %p426, %s33, 0
        %s428 = smul.u32 16, %s427
        %s429 = smul.u32 %s33, 128
        %v430 = vld [vmem:[%s422] sm:$0xff]
        %v431 = vld [vmem:[%s422 + $0x8] sm:$0xff]
        %v432 = vld [vmem:[%s422 + $0x10] sm:$0xff]
        %v433 = vld [vmem:[%s422 + $0x18] sm:$0xff]
        %v434 = vld [vmem:[%s422 + $0x20] sm:$0xff]
        %v435 = vld [vmem:[%s422 + $0x28] sm:$0xff]
        %v436 = vld [vmem:[%s422 + $0x30] sm:$0xff]
        %v437 = vld [vmem:[%s422 + $0x38] sm:$0xff]
        %v438 = vld [vmem:[%s422 + $0x40] sm:$0xff]
        %v439 = vld [vmem:[%s422 + $0x48] sm:$0xff]
        %v440 = vld [vmem:[%s422 + $0x50] sm:$0xff]
        %v441 = vld [vmem:[%s422 + $0x58] sm:$0xff]
        %v442 = vld [vmem:[%s422 + $0x60] sm:$0xff]
        %v443 = vld [vmem:[%s422 + $0x68] sm:$0xff]
        %v444 = vld [vmem:[%s422 + $0x70] sm:$0xff]
        %v445 = vld [vmem:[%s422 + $0x78] sm:$0xff]
        %p446 = scmp.eq.s32.totalorder %s32, 0
        // Predicated region
        $region61: #{tpu_custom_call.1} parent=47 // pred_check
          %p447 = pneg %p446
        $region62: #{tpu_custom_call.1} parent=47 // pred_check_branch
          %449 = sbr.rel (%p447) target = $region64
        $region63: #{tpu_custom_call.1} parent=47 // pred_region
          %v450 = vld [vmem:[%s416] sm:$0xff]
          %v451 = vld [vmem:[%s416 + $0x8] sm:$0xff]
          %v452 = vld [vmem:[%s416 + $0x10] sm:$0xff]
          %v453 = vld [vmem:[%s416 + $0x18] sm:$0xff]
          %v454 = vld [vmem:[%s416 + $0x20] sm:$0xff]
          %v455 = vld [vmem:[%s416 + $0x28] sm:$0xff]
          %v456 = vld [vmem:[%s416 + $0x30] sm:$0xff]
          %v457 = vld [vmem:[%s416 + $0x38] sm:$0xff]
          %v458 = vld [vmem:[%s416 + $0x40] sm:$0xff]
          %v459 = vld [vmem:[%s416 + $0x48] sm:$0xff]
          %v460 = vld [vmem:[%s416 + $0x50] sm:$0xff]
          %v461 = vld [vmem:[%s416 + $0x58] sm:$0xff]
          %v462 = vld [vmem:[%s416 + $0x60] sm:$0xff]
          %v463 = vld [vmem:[%s416 + $0x68] sm:$0xff]
          %v464 = vld [vmem:[%s416 + $0x70] sm:$0xff]
          %v465 = vld [vmem:[%s416 + $0x78] sm:$0xff]
          %v466 = vld [vmem:[#allocation3] sm:$0xf]
          %v467 = vld [vmem:[#allocation3 + $0x4] sm:$0xf]
          %v468 = vld [vmem:[#allocation3 + $0x8] sm:$0xf]
          %v469 = vld [vmem:[#allocation3 + $0xc] sm:$0xf]
          %v470 = vld [vmem:[#allocation3 + $0x10] sm:$0xf]
          %v471 = vld [vmem:[#allocation3 + $0x14] sm:$0xf]
          %v472 = vld [vmem:[#allocation3 + $0x18] sm:$0xf]
          %v473 = vld [vmem:[#allocation3 + $0x1c] sm:$0xf]
          %v474 = vld [vmem:[#allocation3 + $0x20] sm:$0xf]
          %v475 = vld [vmem:[#allocation3 + $0x24] sm:$0xf]
          %v476 = vld [vmem:[#allocation3 + $0x28] sm:$0xf]
          %v477 = vld [vmem:[#allocation3 + $0x2c] sm:$0xf]
          %v478 = vld [vmem:[#allocation3 + $0x30] sm:$0xf]
          %v479 = vld [vmem:[#allocation3 + $0x34] sm:$0xf]
          %v480 = vld [vmem:[#allocation3 + $0x38] sm:$0xf]
          %v481 = vld [vmem:[#allocation3 + $0x3c] sm:$0xf]
          %v482 = vld [vmem:[#allocation3 + $0x40] sm:$0xf]
          %v483 = vld [vmem:[#allocation3 + $0x44] sm:$0xf]
          %v484 = vld [vmem:[#allocation3 + $0x48] sm:$0xf]
          %v485 = vld [vmem:[#allocation3 + $0x4c] sm:$0xf]
          %v486 = vld [vmem:[#allocation3 + $0x50] sm:$0xf]
          %v487 = vld [vmem:[#allocation3 + $0x54] sm:$0xf]
          %v488 = vld [vmem:[#allocation3 + $0x58] sm:$0xf]
          %v489 = vld [vmem:[#allocation3 + $0x5c] sm:$0xf]
          %v490 = vld [vmem:[#allocation3 + $0x60] sm:$0xf]
          %v491 = vld [vmem:[#allocation3 + $0x64] sm:$0xf]
          %v492 = vld [vmem:[#allocation3 + $0x68] sm:$0xf]
          %v493 = vld [vmem:[#allocation3 + $0x6c] sm:$0xf]
          %v494 = vld [vmem:[#allocation3 + $0x70] sm:$0xf]
          %v495 = vld [vmem:[#allocation3 + $0x74] sm:$0xf]
          %v496 = vld [vmem:[#allocation3 + $0x78] sm:$0xf]
          %v497 = vld [vmem:[#allocation3 + $0x7c] sm:$0xf]
          %v514 = vunpack.c.l.b16 %v450
          %v515 = vunpack.c.h.b16 %v450
          %v516 = vunpack.c.l.b16 %v451
          %v517 = vunpack.c.h.b16 %v451
          %v518 = vunpack.c.l.b16 %v452
          %v519 = vunpack.c.h.b16 %v452
          %v520 = vunpack.c.l.b16 %v453
          %v521 = vunpack.c.h.b16 %v453
          %v522 = vunpack.c.l.b16 %v454
          %v523 = vunpack.c.h.b16 %v454
          %v524 = vunpack.c.l.b16 %v455
          %v525 = vunpack.c.h.b16 %v455
          %v526 = vunpack.c.l.b16 %v456
          %v527 = vunpack.c.h.b16 %v456
          %v528 = vunpack.c.l.b16 %v457
          %v529 = vunpack.c.h.b16 %v457
          %v530 = vunpack.c.l.b16 %v458
          %v531 = vunpack.c.h.b16 %v458
          %v532 = vunpack.c.l.b16 %v459
          %v533 = vunpack.c.h.b16 %v459
          %v534 = vunpack.c.l.b16 %v460
          %v535 = vunpack.c.h.b16 %v460
          %v536 = vunpack.c.l.b16 %v461
          %v537 = vunpack.c.h.b16 %v461
          %v538 = vunpack.c.l.b16 %v462
          %v539 = vunpack.c.h.b16 %v462
          %v540 = vunpack.c.l.b16 %v463
          %v541 = vunpack.c.h.b16 %v463
          %v542 = vunpack.c.l.b16 %v464
          %v543 = vunpack.c.h.b16 %v464
          %v544 = vunpack.c.l.b16 %v465
          %v545 = vunpack.c.h.b16 %v465
          %v546 = vpack.c.b16 %v516, %v514
          %v547 = vpack.c.b16 %v517, %v515
          %v548 = vpack.c.b16 %v520, %v518
          %v549 = vpack.c.b16 %v521, %v519
          %v550 = vpack.c.b16 %v524, %v522
          %v551 = vpack.c.b16 %v525, %v523
          %v552 = vpack.c.b16 %v528, %v526
          %v553 = vpack.c.b16 %v529, %v527
          %v554 = vpack.c.b16 %v532, %v530
          %v555 = vpack.c.b16 %v533, %v531
          %v556 = vpack.c.b16 %v536, %v534
          %v557 = vpack.c.b16 %v537, %v535
          %v558 = vpack.c.b16 %v540, %v538
          %v559 = vpack.c.b16 %v541, %v539
          %v560 = vpack.c.b16 %v544, %v542
          %v561 = vpack.c.b16 %v545, %v543
          %v610 = vunpack.c.l.b16 %v466
          %v611 = vunpack.c.l.b16 %v467
          %v612 = vunpack.c.l.b16 %v468
          %v613 = vunpack.c.l.b16 %v469
          %v614 = vunpack.c.l.b16 %v470
          %v615 = vunpack.c.l.b16 %v471
          %v616 = vunpack.c.l.b16 %v472
          %v617 = vunpack.c.l.b16 %v473
          %v618 = vunpack.c.l.b16 %v474
          %v619 = vunpack.c.l.b16 %v475
          %v620 = vunpack.c.l.b16 %v476
          %v621 = vunpack.c.l.b16 %v477
          %v622 = vunpack.c.l.b16 %v478
          %v623 = vunpack.c.l.b16 %v479
          %v624 = vunpack.c.l.b16 %v480
          %v625 = vunpack.c.l.b16 %v481
          %v626 = vunpack.c.l.b16 %v482
          %v627 = vunpack.c.l.b16 %v483
          %v628 = vunpack.c.l.b16 %v484
          %v629 = vunpack.c.l.b16 %v485
          %v630 = vunpack.c.l.b16 %v486
          %v631 = vunpack.c.l.b16 %v487
          %v632 = vunpack.c.l.b16 %v488
          %v633 = vunpack.c.l.b16 %v489
          %v634 = vunpack.c.l.b16 %v490
          %v635 = vunpack.c.l.b16 %v491
          %v636 = vunpack.c.l.b16 %v492
          %v637 = vunpack.c.l.b16 %v493
          %v638 = vunpack.c.l.b16 %v494
          %v639 = vunpack.c.l.b16 %v495
          %v640 = vunpack.c.l.b16 %v496
          %v641 = vunpack.c.l.b16 %v497
          %v642 = vpack.c.b16 %v611, %v610
          %v643 = vpack.c.b16 %v613, %v612
          %v644 = vpack.c.b16 %v615, %v614
          %v645 = vpack.c.b16 %v617, %v616
          %v646 = vpack.c.b16 %v619, %v618
          %v647 = vpack.c.b16 %v621, %v620
          %v648 = vpack.c.b16 %v623, %v622
          %v649 = vpack.c.b16 %v625, %v624
          %v650 = vpack.c.b16 %v627, %v626
          %v651 = vpack.c.b16 %v629, %v628
          %v652 = vpack.c.b16 %v631, %v630
          %v653 = vpack.c.b16 %v633, %v632
          %v654 = vpack.c.b16 %v635, %v634
          %v655 = vpack.c.b16 %v637, %v636
          %v656 = vpack.c.b16 %v639, %v638
          %v657 = vpack.c.b16 %v641, %v640
          %674 = vmatpush.bf16.msra.mxu0 %v649
          %675 = vmatpush.bf16.msra.mxu0 %v648
          %676 = vmatpush.bf16.msra.mxu0 %v647
          %677 = vmatpush.bf16.msra.mxu0 %v646
          %678 = vmatpush.bf16.msra.mxu0 %v645
          %679 = vmatpush.bf16.msra.mxu0 %v644
          %680 = vmatpush.bf16.msra.mxu0 %v643
          %681 = vmatpush.bf16.msra.mxu0 %v642
          %682 = vmatmul.bf16.gmra.mxu0 %v546
          %v683 = vpop.f32.mrf.mxu0
          %v684 = vadd.f32 0.0, %v683
          %v685 = vpop.f32.mrf.mxu0
          %v686 = vadd.f32 0.0, %v685
          %687 = vmatmul.bf16.gmra.mxu0 %v548
          %v688 = vpop.f32.mrf.mxu0
          %v689 = vadd.f32 0.0, %v688
          %v690 = vpop.f32.mrf.mxu0
          %v691 = vadd.f32 0.0, %v690
          %692 = vmatmul.bf16.gmra.mxu0 %v550
          %v693 = vpop.f32.mrf.mxu0
          %v694 = vadd.f32 0.0, %v693
          %v695 = vpop.f32.mrf.mxu0
          %v696 = vadd.f32 0.0, %v695
          %697 = vmatmul.bf16.gmra.mxu0 %v552
          %v698 = vpop.f32.mrf.mxu0
          %v699 = vadd.f32 0.0, %v698
          %v700 = vpop.f32.mrf.mxu0
          %v701 = vadd.f32 0.0, %v700
          %702 = vmatmul.bf16.gmra.mxu0 %v554
          %v703 = vpop.f32.mrf.mxu0
          %v704 = vadd.f32 0.0, %v703
          %v705 = vpop.f32.mrf.mxu0
          %v706 = vadd.f32 0.0, %v705
          %707 = vmatmul.bf16.gmra.mxu0 %v556
          %v708 = vpop.f32.mrf.mxu0
          %v709 = vadd.f32 0.0, %v708
          %v710 = vpop.f32.mrf.mxu0
          %v711 = vadd.f32 0.0, %v710
          %712 = vmatmul.bf16.gmra.mxu0 %v558
          %v713 = vpop.f32.mrf.mxu0
          %v714 = vadd.f32 0.0, %v713
          %v715 = vpop.f32.mrf.mxu0
          %v716 = vadd.f32 0.0, %v715
          %717 = vmatmul.bf16.gmra.mxu0 %v560
          %v718 = vpop.f32.mrf.mxu0
          %v719 = vadd.f32 0.0, %v718
          %v720 = vpop.f32.mrf.mxu0
          %v721 = vadd.f32 0.0, %v720
          %722 = vdwg.mxu0
          %723 = vmatpush.bf16.msra.mxu0 %v657
          %724 = vmatpush.bf16.msra.mxu0 %v656
          %725 = vmatpush.bf16.msra.mxu0 %v655
          %726 = vmatpush.bf16.msra.mxu0 %v654
          %727 = vmatpush.bf16.msra.mxu0 %v653
          %728 = vmatpush.bf16.msra.mxu0 %v652
          %729 = vmatpush.bf16.msra.mxu0 %v651
          %730 = vmatpush.bf16.msra.mxu0 %v650
          %731 = vmatmul.bf16.gmra.mxu0 %v547
          %v732 = vpop.f32.mrf.mxu0
          %v733 = vadd.f32 %v684, %v732
          %v734 = vpop.f32.mrf.mxu0
          %v735 = vadd.f32 %v686, %v734
          %736 = vmatmul.bf16.gmra.mxu0 %v549
          %v737 = vpop.f32.mrf.mxu0
          %v738 = vadd.f32 %v689, %v737
          %v739 = vpop.f32.mrf.mxu0
          %v740 = vadd.f32 %v691, %v739
          %741 = vmatmul.bf16.gmra.mxu0 %v551
          %v742 = vpop.f32.mrf.mxu0
          %v743 = vadd.f32 %v694, %v742
          %v744 = vpop.f32.mrf.mxu0
          %v745 = vadd.f32 %v696, %v744
          %746 = vmatmul.bf16.gmra.mxu0 %v553
          %v747 = vpop.f32.mrf.mxu0
          %v748 = vadd.f32 %v699, %v747
          %v749 = vpop.f32.mrf.mxu0
          %v750 = vadd.f32 %v701, %v749
          %751 = vmatmul.bf16.gmra.mxu0 %v555
          %v752 = vpop.f32.mrf.mxu0
          %v753 = vadd.f32 %v704, %v752
          %v754 = vpop.f32.mrf.mxu0
          %v755 = vadd.f32 %v706, %v754
          %756 = vmatmul.bf16.gmra.mxu0 %v557
          %v757 = vpop.f32.mrf.mxu0
          %v758 = vadd.f32 %v709, %v757
          %v759 = vpop.f32.mrf.mxu0
          %v760 = vadd.f32 %v711, %v759
          %761 = vmatmul.bf16.gmra.mxu0 %v559
          %v762 = vpop.f32.mrf.mxu0
          %v763 = vadd.f32 %v714, %v762
          %v764 = vpop.f32.mrf.mxu0
          %v765 = vadd.f32 %v716, %v764
          %766 = vmatmul.bf16.gmra.mxu0 %v561
          %v767 = vpop.f32.mrf.mxu0
          %v768 = vadd.f32 %v719, %v767
          %v769 = vpop.f32.mrf.mxu0
          %v770 = vadd.f32 %v721, %v769
          %771 = vdwg.mxu0
          %773 = vset.pattern.permute.xlu0 0
          %774 = vperm.xlu0 %773, %v430
          %v775 = vpop.permute.xlu0 %774
          %778 = vset.pattern.permute.xlu0 0
          %779 = vperm.xlu0 %778, %v431
          %v780 = vpop.permute.xlu0 %779
          %783 = vset.pattern.permute.xlu0 0
          %784 = vperm.xlu0 %783, %v432
          %v785 = vpop.permute.xlu0 %784
          %788 = vset.pattern.permute.xlu0 0
          %789 = vperm.xlu0 %788, %v433
          %v790 = vpop.permute.xlu0 %789
          %793 = vset.pattern.permute.xlu0 0
          %794 = vperm.xlu0 %793, %v434
          %v795 = vpop.permute.xlu0 %794
          %798 = vset.pattern.permute.xlu0 0
          %799 = vperm.xlu0 %798, %v435
          %v800 = vpop.permute.xlu0 %799
          %803 = vset.pattern.permute.xlu0 0
          %804 = vperm.xlu0 %803, %v436
          %v805 = vpop.permute.xlu0 %804
          %808 = vset.pattern.permute.xlu0 0
          %809 = vperm.xlu0 %808, %v437
          %v810 = vpop.permute.xlu0 %809
          %813 = vset.pattern.permute.xlu0 0
          %814 = vperm.xlu0 %813, %v438
          %v815 = vpop.permute.xlu0 %814
          %818 = vset.pattern.permute.xlu0 0
          %819 = vperm.xlu0 %818, %v439
          %v820 = vpop.permute.xlu0 %819
          %823 = vset.pattern.permute.xlu0 0
          %824 = vperm.xlu0 %823, %v440
          %v825 = vpop.permute.xlu0 %824
          %828 = vset.pattern.permute.xlu0 0
          %829 = vperm.xlu0 %828, %v441
          %v830 = vpop.permute.xlu0 %829
          %833 = vset.pattern.permute.xlu0 0
          %834 = vperm.xlu0 %833, %v442
          %v835 = vpop.permute.xlu0 %834
          %838 = vset.pattern.permute.xlu0 0
          %839 = vperm.xlu0 %838, %v443
          %v840 = vpop.permute.xlu0 %839
          %843 = vset.pattern.permute.xlu0 0
          %844 = vperm.xlu0 %843, %v444
          %v845 = vpop.permute.xlu0 %844
          %848 = vset.pattern.permute.xlu0 0
          %849 = vperm.xlu0 %848, %v445
          %v850 = vpop.permute.xlu0 %849
          %v852 = vmul.f32 %v775, %v733
          %v853 = vmul.f32 %v780, %v735
          %v854 = vmul.f32 %v785, %v738
          %v855 = vmul.f32 %v790, %v740
          %v856 = vmul.f32 %v795, %v743
          %v857 = vmul.f32 %v800, %v745
          %v858 = vmul.f32 %v805, %v748
          %v859 = vmul.f32 %v810, %v750
          %v860 = vmul.f32 %v815, %v753
          %v861 = vmul.f32 %v820, %v755
          %v862 = vmul.f32 %v825, %v758
          %v863 = vmul.f32 %v830, %v760
          %v864 = vmul.f32 %v835, %v763
          %v865 = vmul.f32 %v840, %v765
          %v866 = vmul.f32 %v845, %v768
          %v867 = vmul.f32 %v850, %v770
          %v868 = vld [vmem:[%s5] sm:$0x1]
          %v870 = vperm.slane %v868, 0
          %v872 = vadd.f32 %v852, %v870
          %v873 = vadd.f32 %v853, %v870
          %v874 = vadd.f32 %v854, %v870
          %v875 = vadd.f32 %v855, %v870
          %v876 = vadd.f32 %v856, %v870
          %v877 = vadd.f32 %v857, %v870
          %v878 = vadd.f32 %v858, %v870
          %v879 = vadd.f32 %v859, %v870
          %v880 = vadd.f32 %v860, %v870
          %v881 = vadd.f32 %v861, %v870
          %v882 = vadd.f32 %v862, %v870
          %v883 = vadd.f32 %v863, %v870
          %v884 = vadd.f32 %v864, %v870
          %v885 = vadd.f32 %v865, %v870
          %v886 = vadd.f32 %v866, %v870
          %v887 = vadd.f32 %v867, %v870
          %v888 = vmax.f32 %v872, 0.0
          %v889 = vmax.f32 %v873, 0.0
          %v890 = vmax.f32 %v874, 0.0
          %v891 = vmax.f32 %v875, 0.0
          %v892 = vmax.f32 %v876, 0.0
          %v893 = vmax.f32 %v877, 0.0
          %v894 = vmax.f32 %v878, 0.0
          %v895 = vmax.f32 %v879, 0.0
          %v896 = vmax.f32 %v880, 0.0
          %v897 = vmax.f32 %v881, 0.0
          %v898 = vmax.f32 %v882, 0.0
          %v899 = vmax.f32 %v883, 0.0
          %v900 = vmax.f32 %v884, 0.0
          %v901 = vmax.f32 %v885, 0.0
          %v902 = vmax.f32 %v886, 0.0
          %v903 = vmax.f32 %v887, 0.0
          %v904 = vpack.c.bf16 %v889, %v888
          %v905 = vpack.c.bf16 %v891, %v890
          %v906 = vpack.c.bf16 %v893, %v892
          %v907 = vpack.c.bf16 %v895, %v894
          %v908 = vpack.c.bf16 %v897, %v896
          %v909 = vpack.c.bf16 %v899, %v898
          %v910 = vpack.c.bf16 %v901, %v900
          %v911 = vpack.c.bf16 %v903, %v902
          %v912 = vld [vmem:[#allocation8] sm:$0xf]
          %v913 = vld [vmem:[#allocation8 + $0x4] sm:$0xf]
          %v914 = vld [vmem:[#allocation8 + $0x8] sm:$0xf]
          %v915 = vld [vmem:[#allocation8 + $0xc] sm:$0xf]
          %v916 = vld [vmem:[#allocation8 + $0x10] sm:$0xf]
          %v917 = vld [vmem:[#allocation8 + $0x14] sm:$0xf]
          %v918 = vld [vmem:[#allocation8 + $0x18] sm:$0xf]
          %v919 = vld [vmem:[#allocation8 + $0x1c] sm:$0xf]
          %v920 = vld [vmem:[#allocation8 + $0x20] sm:$0xf]
          %v921 = vld [vmem:[#allocation8 + $0x24] sm:$0xf]
          %v922 = vld [vmem:[#allocation8 + $0x28] sm:$0xf]
          %v923 = vld [vmem:[#allocation8 + $0x2c] sm:$0xf]
          %v924 = vld [vmem:[#allocation8 + $0x30] sm:$0xf]
          %v925 = vld [vmem:[#allocation8 + $0x34] sm:$0xf]
          %v926 = vld [vmem:[#allocation8 + $0x38] sm:$0xf]
          %v927 = vld [vmem:[#allocation8 + $0x3c] sm:$0xf]
          %v944 = vunpack.c.l.b16 %v912
          %v945 = vunpack.c.l.b16 %v913
          %v946 = vunpack.c.l.b16 %v914
          %v947 = vunpack.c.l.b16 %v915
          %v948 = vunpack.c.l.b16 %v916
          %v949 = vunpack.c.l.b16 %v917
          %v950 = vunpack.c.l.b16 %v918
          %v951 = vunpack.c.l.b16 %v919
          %v952 = vunpack.c.l.b16 %v920
          %v953 = vunpack.c.l.b16 %v921
          %v954 = vunpack.c.l.b16 %v922
          %v955 = vunpack.c.l.b16 %v923
          %v956 = vunpack.c.l.b16 %v924
          %v957 = vunpack.c.l.b16 %v925
          %v958 = vunpack.c.l.b16 %v926
          %v959 = vunpack.c.l.b16 %v927
          %v960 = vpack.c.b16 %v945, %v944
          %v961 = vpack.c.b16 %v947, %v946
          %v962 = vpack.c.b16 %v949, %v948
          %v963 = vpack.c.b16 %v951, %v950
          %v964 = vpack.c.b16 %v953, %v952
          %v965 = vpack.c.b16 %v955, %v954
          %v966 = vpack.c.b16 %v957, %v956
          %v967 = vpack.c.b16 %v959, %v958
          %976 = vmatpush.bf16.msra.mxu0 %v967
          %977 = vmatpush.bf16.msra.mxu0 %v966
          %978 = vmatpush.bf16.msra.mxu0 %v965
          %979 = vmatpush.bf16.msra.mxu0 %v964
          %980 = vmatpush.bf16.msra.mxu0 %v963
          %981 = vmatpush.bf16.msra.mxu0 %v962
          %982 = vmatpush.bf16.msra.mxu0 %v961
          %983 = vmatpush.bf16.msra.mxu0 %v960
          %984 = vmatmul.bf16.gmra.mxu0 %v904
          %v985 = vpop.f32.mrf.mxu0
          %v986 = vadd.f32 0.0, %v985
          %v987 = vpop.f32.mrf.mxu0
          %v988 = vadd.f32 0.0, %v987
          %989 = vmatmul.bf16.gmra.mxu0 %v905
          %v990 = vpop.f32.mrf.mxu0
          %v991 = vadd.f32 0.0, %v990
          %v992 = vpop.f32.mrf.mxu0
          %v993 = vadd.f32 0.0, %v992
          %994 = vmatmul.bf16.gmra.mxu0 %v906
          %v995 = vpop.f32.mrf.mxu0
          %v996 = vadd.f32 0.0, %v995
          %v997 = vpop.f32.mrf.mxu0
          %v998 = vadd.f32 0.0, %v997
          %999 = vmatmul.bf16.gmra.mxu0 %v907
          %v1000 = vpop.f32.mrf.mxu0
          %v1001 = vadd.f32 0.0, %v1000
          %v1002 = vpop.f32.mrf.mxu0
          %v1003 = vadd.f32 0.0, %v1002
          %1004 = vmatmul.bf16.gmra.mxu0 %v908
          %v1005 = vpop.f32.mrf.mxu0
          %v1006 = vadd.f32 0.0, %v1005
          %v1007 = vpop.f32.mrf.mxu0
          %v1008 = vadd.f32 0.0, %v1007
          %1009 = vmatmul.bf16.gmra.mxu0 %v909
          %v1010 = vpop.f32.mrf.mxu0
          %v1011 = vadd.f32 0.0, %v1010
          %v1012 = vpop.f32.mrf.mxu0
          %v1013 = vadd.f32 0.0, %v1012
          %1014 = vmatmul.bf16.gmra.mxu0 %v910
          %v1015 = vpop.f32.mrf.mxu0
          %v1016 = vadd.f32 0.0, %v1015
          %v1017 = vpop.f32.mrf.mxu0
          %v1018 = vadd.f32 0.0, %v1017
          %1019 = vmatmul.bf16.gmra.mxu0 %v911
          %v1020 = vpop.f32.mrf.mxu0
          %v1021 = vadd.f32 0.0, %v1020
          %v1022 = vpop.f32.mrf.mxu0
          %v1023 = vadd.f32 0.0, %v1022
          %1024 = vdwg.mxu0
          %v1025 = vmul.f32 %v775, %v986
          %v1026 = vmul.f32 %v780, %v988
          %v1027 = vmul.f32 %v785, %v991
          %v1028 = vmul.f32 %v790, %v993
          %v1029 = vmul.f32 %v795, %v996
          %v1030 = vmul.f32 %v800, %v998
          %v1031 = vmul.f32 %v805, %v1001
          %v1032 = vmul.f32 %v810, %v1003
          %v1033 = vmul.f32 %v815, %v1006
          %v1034 = vmul.f32 %v820, %v1008
          %v1035 = vmul.f32 %v825, %v1011
          %v1036 = vmul.f32 %v830, %v1013
          %v1037 = vmul.f32 %v835, %v1016
          %v1038 = vmul.f32 %v840, %v1018
          %v1039 = vmul.f32 %v845, %v1021
          %v1040 = vmul.f32 %v850, %v1023
          %v1041 = vpack.c.bf16 %v1025, %v1025
          %v1042 = vpack.c.bf16 %v1026, %v1026
          %v1043 = vpack.c.bf16 %v1027, %v1027
          %v1044 = vpack.c.bf16 %v1028, %v1028
          %v1045 = vpack.c.bf16 %v1029, %v1029
          %v1046 = vpack.c.bf16 %v1030, %v1030
          %v1047 = vpack.c.bf16 %v1031, %v1031
          %v1048 = vpack.c.bf16 %v1032, %v1032
          %v1049 = vpack.c.bf16 %v1033, %v1033
          %v1050 = vpack.c.bf16 %v1034, %v1034
          %v1051 = vpack.c.bf16 %v1035, %v1035
          %v1052 = vpack.c.bf16 %v1036, %v1036
          %v1053 = vpack.c.bf16 %v1037, %v1037
          %v1054 = vpack.c.bf16 %v1038, %v1038
          %v1055 = vpack.c.bf16 %v1039, %v1039
          %v1056 = vpack.c.bf16 %v1040, %v1040
          %s1057 = sshra.s32 %s429, 3
          %s1058 = sand.u32 %s429, 7
          %s1059 = smul.addr %s1057, 4
          %s1060 = scalar_lea.vmem [#allocation2], %s1059
          %1061 = vst [vmem:[%s1060] sm:$0xf] %v1041
          %1062 = vst [vmem:[%s1060 + $0x4] sm:$0xf] %v1042
          %1063 = vst [vmem:[%s1060 + $0x8] sm:$0xf] %v1043
          %1064 = vst [vmem:[%s1060 + $0xc] sm:$0xf] %v1044
          %1065 = vst [vmem:[%s1060 + $0x10] sm:$0xf] %v1045
          %1066 = vst [vmem:[%s1060 + $0x14] sm:$0xf] %v1046
          %1067 = vst [vmem:[%s1060 + $0x18] sm:$0xf] %v1047
          %1068 = vst [vmem:[%s1060 + $0x1c] sm:$0xf] %v1048
          %1069 = vst [vmem:[%s1060 + $0x20] sm:$0xf] %v1049
          %1070 = vst [vmem:[%s1060 + $0x24] sm:$0xf] %v1050
          %1071 = vst [vmem:[%s1060 + $0x28] sm:$0xf] %v1051
          %1072 = vst [vmem:[%s1060 + $0x2c] sm:$0xf] %v1052
          %1073 = vst [vmem:[%s1060 + $0x30] sm:$0xf] %v1053
          %1074 = vst [vmem:[%s1060 + $0x34] sm:$0xf] %v1054
          %1075 = vst [vmem:[%s1060 + $0x38] sm:$0xf] %v1055
          %1076 = vst [vmem:[%s1060 + $0x3c] sm:$0xf] %v1056
        $region64: #{tpu_custom_call.1} parent=47 // pred_fallthru
          _
        %p1077 = scmp.eq.s32.totalorder %s32, 1
        // Predicated region
        $region65: #{tpu_custom_call.1} parent=47 // pred_check
          %p1078 = pneg %p1077
        $region66: #{tpu_custom_call.1} parent=47 // pred_check_branch
          %1080 = sbr.rel (%p1078) target = $region68
        $region67: #{tpu_custom_call.1} parent=47 // pred_region
          %v1081 = vld [vmem:[%s416] sm:$0xff]
          %v1082 = vld [vmem:[%s416 + $0x8] sm:$0xff]
          %v1083 = vld [vmem:[%s416 + $0x10] sm:$0xff]
          %v1084 = vld [vmem:[%s416 + $0x18] sm:$0xff]
          %v1085 = vld [vmem:[%s416 + $0x20] sm:$0xff]
          %v1086 = vld [vmem:[%s416 + $0x28] sm:$0xff]
          %v1087 = vld [vmem:[%s416 + $0x30] sm:$0xff]
          %v1088 = vld [vmem:[%s416 + $0x38] sm:$0xff]
          %v1089 = vld [vmem:[%s416 + $0x40] sm:$0xff]
          %v1090 = vld [vmem:[%s416 + $0x48] sm:$0xff]
          %v1091 = vld [vmem:[%s416 + $0x50] sm:$0xff]
          %v1092 = vld [vmem:[%s416 + $0x58] sm:$0xff]
          %v1093 = vld [vmem:[%s416 + $0x60] sm:$0xff]
          %v1094 = vld [vmem:[%s416 + $0x68] sm:$0xff]
          %v1095 = vld [vmem:[%s416 + $0x70] sm:$0xff]
          %v1096 = vld [vmem:[%s416 + $0x78] sm:$0xff]
          %v1097 = vld [vmem:[#allocation2] sm:$0xf]
          %v1098 = vld [vmem:[#allocation2 + $0x4] sm:$0xf]
          %v1099 = vld [vmem:[#allocation2 + $0x8] sm:$0xf]
          %v1100 = vld [vmem:[#allocation2 + $0xc] sm:$0xf]
          %v1101 = vld [vmem:[#allocation2 + $0x10] sm:$0xf]
          %v1102 = vld [vmem:[#allocation2 + $0x14] sm:$0xf]
          %v1103 = vld [vmem:[#allocation2 + $0x18] sm:$0xf]
          %v1104 = vld [vmem:[#allocation2 + $0x1c] sm:$0xf]
          %v1105 = vld [vmem:[#allocation2 + $0x20] sm:$0xf]
          %v1106 = vld [vmem:[#allocation2 + $0x24] sm:$0xf]
          %v1107 = vld [vmem:[#allocation2 + $0x28] sm:$0xf]
          %v1108 = vld [vmem:[#allocation2 + $0x2c] sm:$0xf]
          %v1109 = vld [vmem:[#allocation2 + $0x30] sm:$0xf]
          %v1110 = vld [vmem:[#allocation2 + $0x34] sm:$0xf]
          %v1111 = vld [vmem:[#allocation2 + $0x38] sm:$0xf]
          %v1112 = vld [vmem:[#allocation2 + $0x3c] sm:$0xf]
          %v1113 = vld [vmem:[#allocation2 + $0x40] sm:$0xf]
          %v1114 = vld [vmem:[#allocation2 + $0x44] sm:$0xf]
          %v1115 = vld [vmem:[#allocation2 + $0x48] sm:$0xf]
          %v1116 = vld [vmem:[#allocation2 + $0x4c] sm:$0xf]
          %v1117 = vld [vmem:[#allocation2 + $0x50] sm:$0xf]
          %v1118 = vld [vmem:[#allocation2 + $0x54] sm:$0xf]
          %v1119 = vld [vmem:[#allocation2 + $0x58] sm:$0xf]
          %v1120 = vld [vmem:[#allocation2 + $0x5c] sm:$0xf]
          %v1121 = vld [vmem:[#allocation2 + $0x60] sm:$0xf]
          %v1122 = vld [vmem:[#allocation2 + $0x64] sm:$0xf]
          %v1123 = vld [vmem:[#allocation2 + $0x68] sm:$0xf]
          %v1124 = vld [vmem:[#allocation2 + $0x6c] sm:$0xf]
          %v1125 = vld [vmem:[#allocation2 + $0x70] sm:$0xf]
          %v1126 = vld [vmem:[#allocation2 + $0x74] sm:$0xf]
          %v1127 = vld [vmem:[#allocation2 + $0x78] sm:$0xf]
          %v1128 = vld [vmem:[#allocation2 + $0x7c] sm:$0xf]
          %v1145 = vunpack.c.l.b16 %v1081
          %v1146 = vunpack.c.h.b16 %v1081
          %v1147 = vunpack.c.l.b16 %v1082
          %v1148 = vunpack.c.h.b16 %v1082
          %v1149 = vunpack.c.l.b16 %v1083
          %v1150 = vunpack.c.h.b16 %v1083
          %v1151 = vunpack.c.l.b16 %v1084
          %v1152 = vunpack.c.h.b16 %v1084
          %v1153 = vunpack.c.l.b16 %v1085
          %v1154 = vunpack.c.h.b16 %v1085
          %v1155 = vunpack.c.l.b16 %v1086
          %v1156 = vunpack.c.h.b16 %v1086
          %v1157 = vunpack.c.l.b16 %v1087
          %v1158 = vunpack.c.h.b16 %v1087
          %v1159 = vunpack.c.l.b16 %v1088
          %v1160 = vunpack.c.h.b16 %v1088
          %v1161 = vunpack.c.l.b16 %v1089
          %v1162 = vunpack.c.h.b16 %v1089
          %v1163 = vunpack.c.l.b16 %v1090
          %v1164 = vunpack.c.h.b16 %v1090
          %v1165 = vunpack.c.l.b16 %v1091
          %v1166 = vunpack.c.h.b16 %v1091
          %v1167 = vunpack.c.l.b16 %v1092
          %v1168 = vunpack.c.h.b16 %v1092
          %v1169 = vunpack.c.l.b16 %v1093
          %v1170 = vunpack.c.h.b16 %v1093
          %v1171 = vunpack.c.l.b16 %v1094
          %v1172 = vunpack.c.h.b16 %v1094
          %v1173 = vunpack.c.l.b16 %v1095
          %v1174 = vunpack.c.h.b16 %v1095
          %v1175 = vunpack.c.l.b16 %v1096
          %v1176 = vunpack.c.h.b16 %v1096
          %v1177 = vpack.c.b16 %v1147, %v1145
          %v1178 = vpack.c.b16 %v1148, %v1146
          %v1179 = vpack.c.b16 %v1151, %v1149
          %v1180 = vpack.c.b16 %v1152, %v1150
          %v1181 = vpack.c.b16 %v1155, %v1153
          %v1182 = vpack.c.b16 %v1156, %v1154
          %v1183 = vpack.c.b16 %v1159, %v1157
          %v1184 = vpack.c.b16 %v1160, %v1158
          %v1185 = vpack.c.b16 %v1163, %v1161
          %v1186 = vpack.c.b16 %v1164, %v1162
          %v1187 = vpack.c.b16 %v1167, %v1165
          %v1188 = vpack.c.b16 %v1168, %v1166
          %v1189 = vpack.c.b16 %v1171, %v1169
          %v1190 = vpack.c.b16 %v1172, %v1170
          %v1191 = vpack.c.b16 %v1175, %v1173
          %v1192 = vpack.c.b16 %v1176, %v1174
          %v1241 = vunpack.c.l.b16 %v1097
          %v1242 = vunpack.c.l.b16 %v1098
          %v1243 = vunpack.c.l.b16 %v1099
          %v1244 = vunpack.c.l.b16 %v1100
          %v1245 = vunpack.c.l.b16 %v1101
          %v1246 = vunpack.c.l.b16 %v1102
          %v1247 = vunpack.c.l.b16 %v1103
          %v1248 = vunpack.c.l.b16 %v1104
          %v1249 = vunpack.c.l.b16 %v1105
          %v1250 = vunpack.c.l.b16 %v1106
          %v1251 = vunpack.c.l.b16 %v1107
          %v1252 = vunpack.c.l.b16 %v1108
          %v1253 = vunpack.c.l.b16 %v1109
          %v1254 = vunpack.c.l.b16 %v1110
          %v1255 = vunpack.c.l.b16 %v1111
          %v1256 = vunpack.c.l.b16 %v1112
          %v1257 = vunpack.c.l.b16 %v1113
          %v1258 = vunpack.c.l.b16 %v1114
          %v1259 = vunpack.c.l.b16 %v1115
          %v1260 = vunpack.c.l.b16 %v1116
          %v1261 = vunpack.c.l.b16 %v1117
          %v1262 = vunpack.c.l.b16 %v1118
          %v1263 = vunpack.c.l.b16 %v1119
          %v1264 = vunpack.c.l.b16 %v1120
          %v1265 = vunpack.c.l.b16 %v1121
          %v1266 = vunpack.c.l.b16 %v1122
          %v1267 = vunpack.c.l.b16 %v1123
          %v1268 = vunpack.c.l.b16 %v1124
          %v1269 = vunpack.c.l.b16 %v1125
          %v1270 = vunpack.c.l.b16 %v1126
          %v1271 = vunpack.c.l.b16 %v1127
          %v1272 = vunpack.c.l.b16 %v1128
          %v1273 = vpack.c.b16 %v1242, %v1241
          %v1274 = vpack.c.b16 %v1244, %v1243
          %v1275 = vpack.c.b16 %v1246, %v1245
          %v1276 = vpack.c.b16 %v1248, %v1247
          %v1277 = vpack.c.b16 %v1250, %v1249
          %v1278 = vpack.c.b16 %v1252, %v1251
          %v1279 = vpack.c.b16 %v1254, %v1253
          %v1280 = vpack.c.b16 %v1256, %v1255
          %v1281 = vpack.c.b16 %v1258, %v1257
          %v1282 = vpack.c.b16 %v1260, %v1259
          %v1283 = vpack.c.b16 %v1262, %v1261
          %v1284 = vpack.c.b16 %v1264, %v1263
          %v1285 = vpack.c.b16 %v1266, %v1265
          %v1286 = vpack.c.b16 %v1268, %v1267
          %v1287 = vpack.c.b16 %v1270, %v1269
          %v1288 = vpack.c.b16 %v1272, %v1271
          %1305 = vmatpush.bf16.msra.mxu0 %v1280
          %1306 = vmatpush.bf16.msra.mxu0 %v1279
          %1307 = vmatpush.bf16.msra.mxu0 %v1278
          %1308 = vmatpush.bf16.msra.mxu0 %v1277
          %1309 = vmatpush.bf16.msra.mxu0 %v1276
          %1310 = vmatpush.bf16.msra.mxu0 %v1275
          %1311 = vmatpush.bf16.msra.mxu0 %v1274
          %1312 = vmatpush.bf16.msra.mxu0 %v1273
          %1313 = vmatmul.bf16.gmra.mxu0 %v1177
          %v1314 = vpop.f32.mrf.mxu0
          %v1315 = vadd.f32 0.0, %v1314
          %v1316 = vpop.f32.mrf.mxu0
          %v1317 = vadd.f32 0.0, %v1316
          %1318 = vmatmul.bf16.gmra.mxu0 %v1179
          %v1319 = vpop.f32.mrf.mxu0
          %v1320 = vadd.f32 0.0, %v1319
          %v1321 = vpop.f32.mrf.mxu0
          %v1322 = vadd.f32 0.0, %v1321
          %1323 = vmatmul.bf16.gmra.mxu0 %v1181
          %v1324 = vpop.f32.mrf.mxu0
          %v1325 = vadd.f32 0.0, %v1324
          %v1326 = vpop.f32.mrf.mxu0
          %v1327 = vadd.f32 0.0, %v1326
          %1328 = vmatmul.bf16.gmra.mxu0 %v1183
          %v1329 = vpop.f32.mrf.mxu0
          %v1330 = vadd.f32 0.0, %v1329
          %v1331 = vpop.f32.mrf.mxu0
          %v1332 = vadd.f32 0.0, %v1331
          %1333 = vmatmul.bf16.gmra.mxu0 %v1185
          %v1334 = vpop.f32.mrf.mxu0
          %v1335 = vadd.f32 0.0, %v1334
          %v1336 = vpop.f32.mrf.mxu0
          %v1337 = vadd.f32 0.0, %v1336
          %1338 = vmatmul.bf16.gmra.mxu0 %v1187
          %v1339 = vpop.f32.mrf.mxu0
          %v1340 = vadd.f32 0.0, %v1339
          %v1341 = vpop.f32.mrf.mxu0
          %v1342 = vadd.f32 0.0, %v1341
          %1343 = vmatmul.bf16.gmra.mxu0 %v1189
          %v1344 = vpop.f32.mrf.mxu0
          %v1345 = vadd.f32 0.0, %v1344
          %v1346 = vpop.f32.mrf.mxu0
          %v1347 = vadd.f32 0.0, %v1346
          %1348 = vmatmul.bf16.gmra.mxu0 %v1191
          %v1349 = vpop.f32.mrf.mxu0
          %v1350 = vadd.f32 0.0, %v1349
          %v1351 = vpop.f32.mrf.mxu0
          %v1352 = vadd.f32 0.0, %v1351
          %1353 = vdwg.mxu0
          %1354 = vmatpush.bf16.msra.mxu0 %v1288
          %1355 = vmatpush.bf16.msra.mxu0 %v1287
          %1356 = vmatpush.bf16.msra.mxu0 %v1286
          %1357 = vmatpush.bf16.msra.mxu0 %v1285
          %1358 = vmatpush.bf16.msra.mxu0 %v1284
          %1359 = vmatpush.bf16.msra.mxu0 %v1283
          %1360 = vmatpush.bf16.msra.mxu0 %v1282
          %1361 = vmatpush.bf16.msra.mxu0 %v1281
          %1362 = vmatmul.bf16.gmra.mxu0 %v1178
          %v1363 = vpop.f32.mrf.mxu0
          %v1364 = vadd.f32 %v1315, %v1363
          %v1365 = vpop.f32.mrf.mxu0
          %v1366 = vadd.f32 %v1317, %v1365
          %1367 = vmatmul.bf16.gmra.mxu0 %v1180
          %v1368 = vpop.f32.mrf.mxu0
          %v1369 = vadd.f32 %v1320, %v1368
          %v1370 = vpop.f32.mrf.mxu0
          %v1371 = vadd.f32 %v1322, %v1370
          %1372 = vmatmul.bf16.gmra.mxu0 %v1182
          %v1373 = vpop.f32.mrf.mxu0
          %v1374 = vadd.f32 %v1325, %v1373
          %v1375 = vpop.f32.mrf.mxu0
          %v1376 = vadd.f32 %v1327, %v1375
          %1377 = vmatmul.bf16.gmra.mxu0 %v1184
          %v1378 = vpop.f32.mrf.mxu0
          %v1379 = vadd.f32 %v1330, %v1378
          %v1380 = vpop.f32.mrf.mxu0
          %v1381 = vadd.f32 %v1332, %v1380
          %1382 = vmatmul.bf16.gmra.mxu0 %v1186
          %v1383 = vpop.f32.mrf.mxu0
          %v1384 = vadd.f32 %v1335, %v1383
          %v1385 = vpop.f32.mrf.mxu0
          %v1386 = vadd.f32 %v1337, %v1385
          %1387 = vmatmul.bf16.gmra.mxu0 %v1188
          %v1388 = vpop.f32.mrf.mxu0
          %v1389 = vadd.f32 %v1340, %v1388
          %v1390 = vpop.f32.mrf.mxu0
          %v1391 = vadd.f32 %v1342, %v1390
          %1392 = vmatmul.bf16.gmra.mxu0 %v1190
          %v1393 = vpop.f32.mrf.mxu0
          %v1394 = vadd.f32 %v1345, %v1393
          %v1395 = vpop.f32.mrf.mxu0
          %v1396 = vadd.f32 %v1347, %v1395
          %1397 = vmatmul.bf16.gmra.mxu0 %v1192
          %v1398 = vpop.f32.mrf.mxu0
          %v1399 = vadd.f32 %v1350, %v1398
          %v1400 = vpop.f32.mrf.mxu0
          %v1401 = vadd.f32 %v1352, %v1400
          %1402 = vdwg.mxu0
          %1404 = vset.pattern.permute.xlu0 0
          %1405 = vperm.xlu0 %1404, %v430
          %v1406 = vpop.permute.xlu0 %1405
          %1409 = vset.pattern.permute.xlu0 0
          %1410 = vperm.xlu0 %1409, %v431
          %v1411 = vpop.permute.xlu0 %1410
          %1414 = vset.pattern.permute.xlu0 0
          %1415 = vperm.xlu0 %1414, %v432
          %v1416 = vpop.permute.xlu0 %1415
          %1419 = vset.pattern.permute.xlu0 0
          %1420 = vperm.xlu0 %1419, %v433
          %v1421 = vpop.permute.xlu0 %1420
          %1424 = vset.pattern.permute.xlu0 0
          %1425 = vperm.xlu0 %1424, %v434
          %v1426 = vpop.permute.xlu0 %1425
          %1429 = vset.pattern.permute.xlu0 0
          %1430 = vperm.xlu0 %1429, %v435
          %v1431 = vpop.permute.xlu0 %1430
          %1434 = vset.pattern.permute.xlu0 0
          %1435 = vperm.xlu0 %1434, %v436
          %v1436 = vpop.permute.xlu0 %1435
          %1439 = vset.pattern.permute.xlu0 0
          %1440 = vperm.xlu0 %1439, %v437
          %v1441 = vpop.permute.xlu0 %1440
          %1444 = vset.pattern.permute.xlu0 0
          %1445 = vperm.xlu0 %1444, %v438
          %v1446 = vpop.permute.xlu0 %1445
          %1449 = vset.pattern.permute.xlu0 0
          %1450 = vperm.xlu0 %1449, %v439
          %v1451 = vpop.permute.xlu0 %1450
          %1454 = vset.pattern.permute.xlu0 0
          %1455 = vperm.xlu0 %1454, %v440
          %v1456 = vpop.permute.xlu0 %1455
          %1459 = vset.pattern.permute.xlu0 0
          %1460 = vperm.xlu0 %1459, %v441
          %v1461 = vpop.permute.xlu0 %1460
          %1464 = vset.pattern.permute.xlu0 0
          %1465 = vperm.xlu0 %1464, %v442
          %v1466 = vpop.permute.xlu0 %1465
          %1469 = vset.pattern.permute.xlu0 0
          %1470 = vperm.xlu0 %1469, %v443
          %v1471 = vpop.permute.xlu0 %1470
          %1474 = vset.pattern.permute.xlu0 0
          %1475 = vperm.xlu0 %1474, %v444
          %v1476 = vpop.permute.xlu0 %1475
          %1479 = vset.pattern.permute.xlu0 0
          %1480 = vperm.xlu0 %1479, %v445
          %v1481 = vpop.permute.xlu0 %1480
          %v1483 = vmul.f32 %v1406, %v1364
          %v1484 = vmul.f32 %v1411, %v1366
          %v1485 = vmul.f32 %v1416, %v1369
          %v1486 = vmul.f32 %v1421, %v1371
          %v1487 = vmul.f32 %v1426, %v1374
          %v1488 = vmul.f32 %v1431, %v1376
          %v1489 = vmul.f32 %v1436, %v1379
          %v1490 = vmul.f32 %v1441, %v1381
          %v1491 = vmul.f32 %v1446, %v1384
          %v1492 = vmul.f32 %v1451, %v1386
          %v1493 = vmul.f32 %v1456, %v1389
          %v1494 = vmul.f32 %v1461, %v1391
          %v1495 = vmul.f32 %v1466, %v1394
          %v1496 = vmul.f32 %v1471, %v1396
          %v1497 = vmul.f32 %v1476, %v1399
          %v1498 = vmul.f32 %v1481, %v1401
          %v1499 = vld [vmem:[%s6] sm:$0x1]
          %v1501 = vperm.slane %v1499, 0
          %v1503 = vadd.f32 %v1483, %v1501
          %v1504 = vadd.f32 %v1484, %v1501
          %v1505 = vadd.f32 %v1485, %v1501
          %v1506 = vadd.f32 %v1486, %v1501
          %v1507 = vadd.f32 %v1487, %v1501
          %v1508 = vadd.f32 %v1488, %v1501
          %v1509 = vadd.f32 %v1489, %v1501
          %v1510 = vadd.f32 %v1490, %v1501
          %v1511 = vadd.f32 %v1491, %v1501
          %v1512 = vadd.f32 %v1492, %v1501
          %v1513 = vadd.f32 %v1493, %v1501
          %v1514 = vadd.f32 %v1494, %v1501
          %v1515 = vadd.f32 %v1495, %v1501
          %v1516 = vadd.f32 %v1496, %v1501
          %v1517 = vadd.f32 %v1497, %v1501
          %v1518 = vadd.f32 %v1498, %v1501
          %1519 = vst [vmem:[%s408] sm:$0xff] %v1503
          %1520 = vst [vmem:[%s408 + $0x8] sm:$0xff] %v1504
          %1521 = vst [vmem:[%s408 + $0x10] sm:$0xff] %v1505
          %1522 = vst [vmem:[%s408 + $0x18] sm:$0xff] %v1506
          %1523 = vst [vmem:[%s408 + $0x20] sm:$0xff] %v1507
          %1524 = vst [vmem:[%s408 + $0x28] sm:$0xff] %v1508
          %1525 = vst [vmem:[%s408 + $0x30] sm:$0xff] %v1509
          %1526 = vst [vmem:[%s408 + $0x38] sm:$0xff] %v1510
          %1527 = vst [vmem:[%s408 + $0x40] sm:$0xff] %v1511
          %1528 = vst [vmem:[%s408 + $0x48] sm:$0xff] %v1512
          %1529 = vst [vmem:[%s408 + $0x50] sm:$0xff] %v1513
          %1530 = vst [vmem:[%s408 + $0x58] sm:$0xff] %v1514
          %1531 = vst [vmem:[%s408 + $0x60] sm:$0xff] %v1515
          %1532 = vst [vmem:[%s408 + $0x68] sm:$0xff] %v1516
          %1533 = vst [vmem:[%s408 + $0x70] sm:$0xff] %v1517
          %1534 = vst [vmem:[%s408 + $0x78] sm:$0xff] %v1518
          %v1535 = vld [vmem:[%s361] sm:$0xf]
          %v1536 = vpack.c.bf16 %v1504, %v1503
          %v1537 = vpack.c.bf16 %v1506, %v1505
          %v1538 = vpack.c.bf16 %v1508, %v1507
          %v1539 = vpack.c.bf16 %v1510, %v1509
          %v1540 = vpack.c.bf16 %v1512, %v1511
          %v1541 = vpack.c.bf16 %v1514, %v1513
          %v1542 = vpack.c.bf16 %v1516, %v1515
          %v1543 = vpack.c.bf16 %v1518, %v1517
          %1544 = vmatpush.bf16.msra.mxu0 %v1543
          %1545 = vmatpush.bf16.msra.mxu0 %v1542
          %1546 = vmatpush.bf16.msra.mxu0 %v1541
          %1547 = vmatpush.bf16.msra.mxu0 %v1540
          %1548 = vmatpush.bf16.msra.mxu0 %v1539
          %1549 = vmatpush.bf16.msra.mxu0 %v1538
          %1550 = vmatpush.bf16.msra.mxu0 %v1537
          %1551 = vmatpush.bf16.msra.mxu0 %v1536
          %1552 = vmatmul.bf16.gmra.mxu0 %v1535
          %v1553 = vpop.f32.mrf.mxu0
          %v1554 = vadd.f32 0.0, %v1553
          %v1555 = vpop.f32.mrf.mxu0
          %1556 = vdwg.mxu0
          %p1557 = scmp.eq.s32.totalorder %s33, 0
          // Predicated region
          $region69: #{tpu_custom_call.1} parent=67 // pred_check
            %p1558 = pneg %p1557
          $region70: #{tpu_custom_call.1} parent=67 // pred_check_branch
            %1560 = sbr.rel (%p1558) target = $region72
          $region71: #{tpu_custom_call.1} parent=67 // pred_region
            %1561 = vst [vmem:[#allocation10] sm:$0xff] %v1554
          $region72: #{tpu_custom_call.1} parent=67 // pred_fallthru
            _
          %p1562 = scmp.gt.s32.totalorder %s33, 0
          // Predicated region
          $region73: #{tpu_custom_call.1} parent=67 // pred_check
            %p1563 = pneg %p1562
          $region74: #{tpu_custom_call.1} parent=67 // pred_check_branch
            %1565 = sbr.rel (%p1563) target = $region76
          $region75: #{tpu_custom_call.1} parent=67 // pred_region
            %v1566 = vld [vmem:[#allocation10] sm:$0xff]
            %v1567 = vadd.f32 %v1566, %v1554
            %1568 = vst [vmem:[#allocation10] sm:$0xff] %v1567
          $region76: #{tpu_custom_call.1} parent=67 // pred_fallthru
            _
          %p1569 = scmp.eq.s32.totalorder %s33, 1
          // Predicated region
          $region77: #{tpu_custom_call.1} parent=67 // pred_check
            %p1570 = pneg %p1569
          $region78: #{tpu_custom_call.1} parent=67 // pred_check_branch
            %1572 = sbr.rel (%p1570) target = $region80
          $region79: #{tpu_custom_call.1} parent=67 // pred_region
            %v1573 = vld [vmem:[#allocation10] sm:$0xff]
            %v1574 = vlaneseq
            %v1575 = vand.u32 %v1574, 127
            %vm1576 = vcmp.ge.s32.totalorder %v1575, 32
            %vm1577 = vcmp.lt.s32.totalorder %v1575, 64
            %vm1578 = vmand %vm1576, %vm1577
            %v1579 = vtanh.pop %v1573
            %v1580 = vsel %vm1578, %v1579, %v1573
            %1581 = vst [vmem:[#allocation10] sm:$0xff] %v1580
          $region80: #{tpu_custom_call.1} parent=67 // pred_fallthru
            _
        $region68: #{tpu_custom_call.1} parent=47 // pred_fallthru
          _
        %s1582 = sand.u32 %s218, 1
        %s1583 = scalar_lea.sflag [#allocation5], %s1582
        %s1584 = sand.u32 %s218, 1
        %s1585 = smul.addr %s1584, 128
        %s1586 = scalar_lea.vmem [#allocation9], %s1585
        // Predicated region
        $region81: #{tpu_custom_call.1} parent=47 // pred_check
          %p1587 = pneg %p228
        $region82: #{tpu_custom_call.1} parent=47 // pred_check_branch
          %1589 = sbr.rel (%p1587) target = $region84
        $region83: #{tpu_custom_call.1} parent=47 // pred_region
          %p1590 = scmp.eq.s32.totalorder %s32, 1
          %s1591 = scalar_select %p1590, %s33, 0
          %s1592 = smul.u32 16, %s1591
          %1594 = vsyncadd %s1583, 0
          %s1595 = smul.addr %s1592, 8
          %s1596 = scalar_lea.hbm %s7, %s1595
          %s1597 = sshll.u32 %s1586, 4
          %s1598 = int_to_ptr.vmem [resolvable:$true] %s1597
          %s1599 = sshll.u32 %s1596, 4
          %s1600 = int_to_ptr.hbm [resolvable:$true] %s1599
          %1605 = dma.vmem_to_hbm [thread:$0]  %s1598, 2048, %s1600, %s1583, 128, 128, 8
        $region84: #{tpu_custom_call.1} parent=47 // pred_fallthru
          _
        // Predicated region
        $region85: #{tpu_custom_call.1} parent=47 // pred_check
          %p1606 = pneg %p249
        $region86: #{tpu_custom_call.1} parent=47 // pred_check_branch
          %1608 = sbr.rel (%p1606) target = $region88
        $region87: #{tpu_custom_call.1} parent=47 // pred_region
          %1610 = vsyncadd [#allocation11], 0
          %s1612 = sshll.u32 [#allocation10], 4
          %s1613 = int_to_ptr.vmem [resolvable:$true] %s1612
          %s1614 = sshll.u32 %s8, 4
          %s1615 = int_to_ptr.hbm [resolvable:$true] %s1614
          %1617 = dma.vmem_to_hbm [thread:$0]  %s1613, 128, %s1615, [#allocation11]
        $region88: #{tpu_custom_call.1} parent=47 // pred_fallthru
          _
        // Predicated region
        $region89: #{tpu_custom_call.1} parent=47 // pred_check
          %p1618 = pneg %p249
        $region90: #{tpu_custom_call.1} parent=47 // pred_check_branch
          %1620 = sbr.rel (%p1618) target = $region92
        $region91: #{tpu_custom_call.1} parent=47 // pred_region
          %1622 = dma.done [#allocation11], 128
        $region92: #{tpu_custom_call.1} parent=47 // pred_fallthru
          _
      $region48: #{tpu_custom_call.1} parent=5 // pred_fallthru
        _
      %p1623 = scmp.le.s32.totalorder 2, %s23
      // Predicated region
      $region93: #{tpu_custom_call.1} parent=5 // pred_check
        %p1624 = pneg %p1623
      $region94: #{tpu_custom_call.1} parent=5 // pred_check_branch
        %1626 = sbr.rel (%p1624) target = $region96
      $region95: #{tpu_custom_call.1} parent=5 // pred_region
        %s1627 = ssub.s32 %s23, 2
        // Predicated region
        $region97: #{tpu_custom_call.1} parent=95 // pred_check
          %p1628 = pneg %p234
        $region98: #{tpu_custom_call.1} parent=95 // pred_check_branch
          %1630 = sbr.rel (%p1628) target = $region100
        $region99: #{tpu_custom_call.1} parent=95 // pred_region
          %s1631 = sand.u32 %s219, 1
          %s1632 = scalar_lea.sflag [#allocation5], %s1631
          %s1633 = sand.u32 %s219, 1
          %s1634 = smul.addr %s1633, 128
          %s1635 = scalar_lea.vmem [#allocation9], %s1634
          %1637 = dma.done %s1632, 2048
        $region100: #{tpu_custom_call.1} parent=95 // pred_fallthru
          _
      $region96: #{tpu_custom_call.1} parent=5 // pred_fallthru
        _
    $region6: #{tpu_custom_call.1} parent=1 // loop_footer
      %s27 = sadd.s32 1, %s23
    $region7: #{tpu_custom_call.1} parent=1 // loop_footer_branch
      %22 = sbr.rel target = $region3
    $region8: #{tpu_custom_call.1} parent=1 // loop_exit
      _
    %1638 = vsyncpa [#allocation4], 1
    %s1639 = scalar_lea.sflag [#allocation4], 1
    %1640 = vsyncpa %s1639, 1
    %1641 = vsyncpa [#allocation7], 1
    %s1642 = scalar_lea.sflag [#allocation7], 1
    %1643 = vsyncpa %s1642, 1
    %1644 = vsyncpa [#allocation5], 1
    %s1645 = scalar_lea.sflag [#allocation5], 1
    %1646 = vsyncpa %s1645, 1
    %1647 = vsyncpa [#allocation11], 1

</llo_original>
